<compile_context>
chip_gen: v6e
topology: v6e:2x2x1
jax: 0.10.0
libtpu: 0.0.40
codegen_flags: <defaults>
</compile_context>

<pallas_src>
import functools

import jax
import jax.numpy as jnp
import numpy as np
from jax import lax
from jax.experimental import pallas as pl
from jax.experimental.pallas import tpu as pltpu


# ----------------------------- Pallas kernel --------------------------------
def _sn_conv_kernel(sigma_inv_ref, w_ref, b_ref, xm_ref, xh_ref, o_ref, xwin_ref,
                    *, shifts, tm):
    """One M-tile of out^T = (W / sigma) @ patches^T + b, with im2col fused in.

    sigma_inv_ref : SMEM (1,)                  scalar 1/sigma
    w_ref         : VMEM (kh*kw, C_out, C_in)  per-tap weights (compute dtype)
    b_ref         : VMEM (C_out, 1)            bias, fp32
    xm_ref        : VMEM (C_in, TM)            main activation window (flattened padded)
    xh_ref        : VMEM (C_in, HALO)          right halo (head of the next TM window)
    o_ref         : VMEM (C_out, TM)           lane-dense output tile, fp32
    xwin_ref      : VMEM scratch (C_in, TM+HALO)
    """
    # Stitch main window + halo so every tap's shifted slice is local to this tile.
    xwin_ref[:, :tm] = xm_ref[...]
    xwin_ref[:, tm:] = xh_ref[...]

    acc = jnp.zeros(o_ref.shape, jnp.float32)
    for t, s in enumerate(shifts):                      # static unroll over kh*kw taps
        x_tap = xwin_ref[:, s:s + tm]                   # (C_in, TM) shifted window
        # (C_out, C_in) x (C_in, TM) -> (C_out, TM); contract on C_in, no transposes.
        acc = acc + lax.dot_general(
            w_ref[t], x_tap,
            dimension_numbers=(((1,), (0,)), ((), ())),
            preferred_element_type=jnp.float32)

    # Epilogue: spectral-norm scale + bias, fp32, lane-dense store.
    o_ref[...] = (acc * sigma_inv_ref[0] + b_ref[...]).astype(o_ref.dtype)


# ------------------------------- JAX glue ------------------------------------
def _l2_normalize(v, eps=1e-12):
    # matches torch.nn.functional.normalize(dim=0, eps=1e-12)
    return v / jnp.maximum(jnp.linalg.norm(v), eps)


@functools.partial(jax.jit, static_argnames=("pad", "tm", "compute_dtype"))
def spectral_conv2d(x, weight, bias, u, *, pad, tm=512, compute_dtype=jnp.bfloat16):
    """Forward of spectral_norm(nn.Conv2d) (training mode, 1 power iteration).

    x      : (N, C_in, H, W)        NCHW, float32
    weight : (C_out, C_in, kh, kw)  float32
    bias   : (C_out,)               float32
    u      : (C_out,)               spectral_norm power-iteration buffer
    Only stride=1 / dilation=1 / groups=1 is supported.
    """
    N, C_in, H, W = x.shape
    C_out, _, kh, kw = weight.shape
    Hp, Wp = H + 2 * pad, W + 2 * pad
    H_out, W_out = Hp - kh + 1, Wp - kw + 1

    # --- spectral norm sigma via one power iteration (tiny; plain JAX glue) ---
    w_mat = weight.reshape(C_out, C_in * kh * kw)
    v = _l2_normalize(w_mat.T @ u)
    u_new = _l2_normalize(w_mat @ v)
    sigma = jnp.dot(u_new, w_mat @ v)
    sigma_inv = (1.0 / sigma).reshape(1).astype(jnp.float32)

    # --- channel-major, spatially padded, flattened activations ---------------
    xc = jnp.transpose(x, (1, 0, 2, 3))                               # (C_in, N, H, W)
    xc = jnp.pad(xc, ((0, 0), (0, 0), (pad, pad), (pad, pad)))        # (C_in, N, Hp, Wp)
    x_flat = xc.reshape(C_in, N * Hp * Wp).astype(compute_dtype)

    # Tap (di, dj) == static lane shift of di*Wp + dj in the flattened padded image.
    shifts = tuple(di * Wp + dj for di in range(kh) for dj in range(kw))
    s_max = shifts[-1]
    halo = max(128, ((s_max + 127) // 128) * 128)       # halo width, multiple of 128
    tm = max(int(tm), halo)
    tm = ((tm + halo - 1) // halo) * halo               # TM multiple of halo (and 128)

    M_total = N * Hp * Wp
    M_pad = ((M_total + tm - 1) // tm) * tm
    # End padding: garbage output columns may read up to s_max past M_pad; keep in-bounds.
    x_flat = jnp.pad(x_flat, ((0, 0), (0, M_pad + halo - M_total)))

    # Per-tap weights (kh*kw, C_out, C_in); bias as a lane-broadcastable column.
    w_taps = jnp.transpose(weight, (2, 3, 0, 1)).reshape(kh * kw, C_out, C_in)
    w_taps = w_taps.astype(compute_dtype)
    b_col = bias.reshape(C_out, 1).astype(jnp.float32)

    grid = (M_pad // tm,)
    halo_blocks_per_tile = tm // halo                   # halo block index stride

    outx = pl.pallas_call(
        functools.partial(_sn_conv_kernel, shifts=shifts, tm=tm),
        out_shape=jax.ShapeDtypeStruct((C_out, M_pad), jnp.float32),
        grid=grid,
        in_specs=[
            pl.BlockSpec(memory_space=pltpu.SMEM),                        # 1/sigma
            pl.BlockSpec((kh * kw, C_out, C_in), lambda i: (0, 0, 0)),    # weights (resident)
            pl.BlockSpec((C_out, 1), lambda i: (0, 0)),                   # bias (resident)
            pl.BlockSpec((C_in, tm), lambda i: (0, i)),                   # x main window
            pl.BlockSpec((C_in, halo),                                    # x right halo
                         lambda i: (0, (i + 1) * halo_blocks_per_tile)),
        ],
        out_specs=pl.BlockSpec((C_out, tm), lambda i: (0, i)),            # lane-dense out^T
        scratch_shapes=[pltpu.VMEM((C_in, tm + halo), compute_dtype)],
        compiler_params=pltpu.CompilerParams(
            dimension_semantics=("parallel",)),   # M tiles shard across v7x's 2 TCs
    )(sigma_inv, w_taps, b_col, x_flat, x_flat)

    # Valid outputs live at flat index n*Hp*Wp + h*Wp + w  (h < H_out, w < W_out).
    out = outx[:, :M_total].reshape(C_out, N, Hp, Wp)[:, :, :H_out, :W_out]
    return jnp.transpose(out, (1, 0, 2, 3))                   # (N, C_out, H_out, W_out)


# --------------------------------- main ---------------------------------------
if __name__ == "__main__":
    # SpectralConv2d(in_channels=4, out_channels=8, kernel_size=3, padding=1)
    N, C_in, H, W = 2, 4, 16, 16
    C_out, kh, kw, pad = 8, 3, 3, 1

    key = jax.random.PRNGKey(0)
    k_x, k_w, k_b, k_u = jax.random.split(key, 4)

    x = jax.random.normal(k_x, (N, C_in, H, W), dtype=jnp.float32)
    weight = jax.random.normal(k_w, (C_out, C_in, kh, kw), dtype=jnp.float32) * 0.1
    bias = jax.random.normal(k_b, (C_out,), dtype=jnp.float32) * 0.1
    # spectral_norm's `u` buffer: normal then normalized (deterministic here)
    u0 = _l2_normalize(jax.random.normal(k_u, (C_out,), dtype=jnp.float32))

    # Reference: same spectral-norm math + plain XLA conv (fp32).
    w_mat = weight.reshape(C_out, -1)
    v = _l2_normalize(w_mat.T @ u0)
    u1 = _l2_normalize(w_mat @ v)
    sigma = jnp.dot(u1, w_mat @ v)
    ref = lax.conv_general_dilated(
        x, weight / sigma, window_strides=(1, 1), padding=((pad, pad), (pad, pad)),
        dimension_numbers=("NCHW", "OIHW", "NCHW")) + bias[None, :, None, None]
    ref = np.asarray(jax.block_until_ready(ref))

    # 1) exact-semantics path (fp32 MXU inputs)
    y32 = spectral_conv2d(x, weight, bias, u0, pad=pad, compute_dtype=jnp.float32)
    y32 = jax.block_until_ready(y32)
    assert y32.shape == (N, C_out, H, W)
    np.testing.assert_allclose(np.asarray(y32), ref, rtol=1e-4, atol=1e-4)

    # 2) performance path (default: bf16 MXU inputs, fp32 accumulation/epilogue)
    y16 = spectral_conv2d(x, weight, bias, u0, pad=pad)
    y16 = jax.block_until_ready(y16)
    assert y16.shape == (N, C_out, H, W)
    np.testing.assert_allclose(np.asarray(y16), ref, rtol=3e-2, atol=3e-2)

    print("KERNEL_OK")
</pallas_src>

<mosaic_0001>
module attributes {stable_mosaic.version = 11 : i64} {
  func.func @_sn_conv_kernel(%arg0: i32, %arg1: memref<1xf32, #tpu.memory_space<smem>>, %arg2: memref<9x8x4xf32, #tpu.memory_space<vmem>>, %arg3: memref<8x1xf32, #tpu.memory_space<vmem>>, %arg4: memref<4x512xf32, #tpu.memory_space<vmem>>, %arg5: memref<4x128xf32, #tpu.memory_space<vmem>>, %arg6: memref<8x512xf32, #tpu.memory_space<vmem>>, %arg7: memref<4x640xf32, #tpu.memory_space<vmem>>) attributes {dimension_semantics = [#tpu.dimension_semantics<parallel>], iteration_bounds = array<i64: 2>, scalar_prefetch = 0 : i64, scratch_operands = 1 : i64, tpu.core_type = #tpu.core_type<tc>, window_params = [{transform_indices = @transform_0, window_bounds = array<i64: 1>}, {pipeline_mode = #tpu.pipeline_mode<synchronous>, transform_indices = @transform_1, window_bounds = array<i64: 9, 8, 4>}, {pipeline_mode = #tpu.pipeline_mode<synchronous>, transform_indices = @transform_2, window_bounds = array<i64: 8, 1>}, {transform_indices = @transform_3, window_bounds = array<i64: 4, 512>}, {transform_indices = @transform_4, window_bounds = array<i64: 4, 128>}, {transform_indices = @transform_5, window_bounds = array<i64: 8, 512>}]} {
    %c0 = arith.constant 0 : index
    %c0_0 = arith.constant 0 : index
    %0 = vector.load %arg4[%c0, %c0_0] : memref<4x512xf32, #tpu.memory_space<vmem>>, vector<4x512xf32>
    %c0_1 = arith.constant 0 : index
    %c0_2 = arith.constant 0 : index
    %1 = vector.load %arg7[%c0_1, %c0_2] : memref<4x640xf32, #tpu.memory_space<vmem>>, vector<4x512xf32>
    tpu.vector_store %arg7[%c0_1, %c0_2], %0 {strides = array<i32>} : memref<4x640xf32, #tpu.memory_space<vmem>>, vector<4x512xf32>,
    %c0_3 = arith.constant 0 : index
    %c0_4 = arith.constant 0 : index
    %2 = vector.load %arg5[%c0_3, %c0_4] : memref<4x128xf32, #tpu.memory_space<vmem>>, vector<4x128xf32>
    %c0_5 = arith.constant 0 : index
    %c512 = arith.constant 512 : index
    %3 = vector.load %arg7[%c0_5, %c512] : memref<4x640xf32, #tpu.memory_space<vmem>>, vector<4x128xf32>
    tpu.vector_store %arg7[%c0_5, %c512], %2 {strides = array<i32>} : memref<4x640xf32, #tpu.memory_space<vmem>>, vector<4x128xf32>,
    %cst = arith.constant 0.000000e+00 : f32
    %4 = vector.broadcast %cst : f32 to vector<8x512xf32>
    %c0_6 = arith.constant 0 : index
    %c0_7 = arith.constant 0 : index
    %5 = vector.load %arg7[%c0_6, %c0_7] : memref<4x640xf32, #tpu.memory_space<vmem>>, vector<4x512xf32>
    %c0_8 = arith.constant 0 : index
    %c0_9 = arith.constant 0 : index
    %c0_10 = arith.constant 0 : index
    %6 = vector.load %arg2[%c0_8, %c0_9, %c0_10] : memref<9x8x4xf32, #tpu.memory_space<vmem>>, vector<1x8x4xf32>
    %7 = vector.shape_cast %6 : vector<1x8x4xf32> to vector<8x4xf32>
    %cst_11 = arith.constant dense<0.000000e+00> : vector<8x512xf32>
    %8 = tpu.matmul %7, %5, %cst_11 {dimension_numbers = #tpu.dot_dimension_numbers<[1], [0], [0], [1], [0, 0, 1, 1], [], []>} : vector<8x4xf32>, vector<4x512xf32>, vector<8x512xf32> -> vector<8x512xf32>
    %9 = arith.addf %4, %8 : vector<8x512xf32>
    %c0_12 = arith.constant 0 : index
    %c1 = arith.constant 1 : index
    %10 = vector.load %arg7[%c0_12, %c1] : memref<4x640xf32, #tpu.memory_space<vmem>>, vector<4x512xf32>
    %c1_13 = arith.constant 1 : index
    %c0_14 = arith.constant 0 : index
    %c0_15 = arith.constant 0 : index
    %11 = vector.load %arg2[%c1_13, %c0_14, %c0_15] : memref<9x8x4xf32, #tpu.memory_space<vmem>>, vector<1x8x4xf32>
    %12 = vector.shape_cast %11 : vector<1x8x4xf32> to vector<8x4xf32>
    %cst_16 = arith.constant dense<0.000000e+00> : vector<8x512xf32>
    %13 = tpu.matmul %12, %10, %cst_16 {dimension_numbers = #tpu.dot_dimension_numbers<[1], [0], [0], [1], [0, 0, 1, 1], [], []>} : vector<8x4xf32>, vector<4x512xf32>, vector<8x512xf32> -> vector<8x512xf32>
    %14 = arith.addf %9, %13 : vector<8x512xf32>
    %c0_17 = arith.constant 0 : index
    %c2 = arith.constant 2 : index
    %15 = vector.load %arg7[%c0_17, %c2] : memref<4x640xf32, #tpu.memory_space<vmem>>, vector<4x512xf32>
    %c2_18 = arith.constant 2 : index
    %c0_19 = arith.constant 0 : index
    %c0_20 = arith.constant 0 : index
    %16 = vector.load %arg2[%c2_18, %c0_19, %c0_20] : memref<9x8x4xf32, #tpu.memory_space<vmem>>, vector<1x8x4xf32>
    %17 = vector.shape_cast %16 : vector<1x8x4xf32> to vector<8x4xf32>
    %cst_21 = arith.constant dense<0.000000e+00> : vector<8x512xf32>
    %18 = tpu.matmul %17, %15, %cst_21 {dimension_numbers = #tpu.dot_dimension_numbers<[1], [0], [0], [1], [0, 0, 1, 1], [], []>} : vector<8x4xf32>, vector<4x512xf32>, vector<8x512xf32> -> vector<8x512xf32>
    %19 = arith.addf %14, %18 : vector<8x512xf32>
    %c0_22 = arith.constant 0 : index
    %c18 = arith.constant 18 : index
    %20 = vector.load %arg7[%c0_22, %c18] : memref<4x640xf32, #tpu.memory_space<vmem>>, vector<4x512xf32>
    %c3 = arith.constant 3 : index
    %c0_23 = arith.constant 0 : index
    %c0_24 = arith.constant 0 : index
    %21 = vector.load %arg2[%c3, %c0_23, %c0_24] : memref<9x8x4xf32, #tpu.memory_space<vmem>>, vector<1x8x4xf32>
    %22 = vector.shape_cast %21 : vector<1x8x4xf32> to vector<8x4xf32>
    %cst_25 = arith.constant dense<0.000000e+00> : vector<8x512xf32>
    %23 = tpu.matmul %22, %20, %cst_25 {dimension_numbers = #tpu.dot_dimension_numbers<[1], [0], [0], [1], [0, 0, 1, 1], [], []>} : vector<8x4xf32>, vector<4x512xf32>, vector<8x512xf32> -> vector<8x512xf32>
    %24 = arith.addf %19, %23 : vector<8x512xf32>
    %c0_26 = arith.constant 0 : index
    %c19 = arith.constant 19 : index
    %25 = vector.load %arg7[%c0_26, %c19] : memref<4x640xf32, #tpu.memory_space<vmem>>, vector<4x512xf32>
    %c4 = arith.constant 4 : index
    %c0_27 = arith.constant 0 : index
    %c0_28 = arith.constant 0 : index
    %26 = vector.load %arg2[%c4, %c0_27, %c0_28] : memref<9x8x4xf32, #tpu.memory_space<vmem>>, vector<1x8x4xf32>
    %27 = vector.shape_cast %26 : vector<1x8x4xf32> to vector<8x4xf32>
    %cst_29 = arith.constant dense<0.000000e+00> : vector<8x512xf32>
    %28 = tpu.matmul %27, %25, %cst_29 {dimension_numbers = #tpu.dot_dimension_numbers<[1], [0], [0], [1], [0, 0, 1, 1], [], []>} : vector<8x4xf32>, vector<4x512xf32>, vector<8x512xf32> -> vector<8x512xf32>
    %29 = arith.addf %24, %28 : vector<8x512xf32>
    %c0_30 = arith.constant 0 : index
    %c20 = arith.constant 20 : index
    %30 = vector.load %arg7[%c0_30, %c20] : memref<4x640xf32, #tpu.memory_space<vmem>>, vector<4x512xf32>
    %c5 = arith.constant 5 : index
    %c0_31 = arith.constant 0 : index
    %c0_32 = arith.constant 0 : index
    %31 = vector.load %arg2[%c5, %c0_31, %c0_32] : memref<9x8x4xf32, #tpu.memory_space<vmem>>, vector<1x8x4xf32>
    %32 = vector.shape_cast %31 : vector<1x8x4xf32> to vector<8x4xf32>
    %cst_33 = arith.constant dense<0.000000e+00> : vector<8x512xf32>
    %33 = tpu.matmul %32, %30, %cst_33 {dimension_numbers = #tpu.dot_dimension_numbers<[1], [0], [0], [1], [0, 0, 1, 1], [], []>} : vector<8x4xf32>, vector<4x512xf32>, vector<8x512xf32> -> vector<8x512xf32>
    %34 = arith.addf %29, %33 : vector<8x512xf32>
    %c0_34 = arith.constant 0 : index
    %c36 = arith.constant 36 : index
    %35 = vector.load %arg7[%c0_34, %c36] : memref<4x640xf32, #tpu.memory_space<vmem>>, vector<4x512xf32>
    %c6 = arith.constant 6 : index
    %c0_35 = arith.constant 0 : index
    %c0_36 = arith.constant 0 : index
    %36 = vector.load %arg2[%c6, %c0_35, %c0_36] : memref<9x8x4xf32, #tpu.memory_space<vmem>>, vector<1x8x4xf32>
    %37 = vector.shape_cast %36 : vector<1x8x4xf32> to vector<8x4xf32>
    %cst_37 = arith.constant dense<0.000000e+00> : vector<8x512xf32>
    %38 = tpu.matmul %37, %35, %cst_37 {dimension_numbers = #tpu.dot_dimension_numbers<[1], [0], [0], [1], [0, 0, 1, 1], [], []>} : vector<8x4xf32>, vector<4x512xf32>, vector<8x512xf32> -> vector<8x512xf32>
    %39 = arith.addf %34, %38 : vector<8x512xf32>
    %c0_38 = arith.constant 0 : index
    %c37 = arith.constant 37 : index
    %40 = vector.load %arg7[%c0_38, %c37] : memref<4x640xf32, #tpu.memory_space<vmem>>, vector<4x512xf32>
    %c7 = arith.constant 7 : index
    %c0_39 = arith.constant 0 : index
    %c0_40 = arith.constant 0 : index
    %41 = vector.load %arg2[%c7, %c0_39, %c0_40] : memref<9x8x4xf32, #tpu.memory_space<vmem>>, vector<1x8x4xf32>
    %42 = vector.shape_cast %41 : vector<1x8x4xf32> to vector<8x4xf32>
    %cst_41 = arith.constant dense<0.000000e+00> : vector<8x512xf32>
    %43 = tpu.matmul %42, %40, %cst_41 {dimension_numbers = #tpu.dot_dimension_numbers<[1], [0], [0], [1], [0, 0, 1, 1], [], []>} : vector<8x4xf32>, vector<4x512xf32>, vector<8x512xf32> -> vector<8x512xf32>
    %44 = arith.addf %39, %43 : vector<8x512xf32>
    %c0_42 = arith.constant 0 : index
    %c38 = arith.constant 38 : index
    %45 = vector.load %arg7[%c0_42, %c38] : memref<4x640xf32, #tpu.memory_space<vmem>>, vector<4x512xf32>
    %c8 = arith.constant 8 : index
    %c0_43 = arith.constant 0 : index
    %c0_44 = arith.constant 0 : index
    %46 = vector.load %arg2[%c8, %c0_43, %c0_44] : memref<9x8x4xf32, #tpu.memory_space<vmem>>, vector<1x8x4xf32>
    %47 = vector.shape_cast %46 : vector<1x8x4xf32> to vector<8x4xf32>
    %cst_45 = arith.constant dense<0.000000e+00> : vector<8x512xf32>
    %48 = tpu.matmul %47, %45, %cst_45 {dimension_numbers = #tpu.dot_dimension_numbers<[1], [0], [0], [1], [0, 0, 1, 1], [], []>} : vector<8x4xf32>, vector<4x512xf32>, vector<8x512xf32> -> vector<8x512xf32>
    %49 = arith.addf %44, %48 : vector<8x512xf32>
    %c0_46 = arith.constant 0 : index
    %50 = memref.load %arg1[%c0_46] : memref<1xf32, #tpu.memory_space<smem>>
    %51 = vector.broadcast %50 : f32 to vector<8x512xf32>
    %52 = arith.mulf %49, %51 : vector<8x512xf32>
    %c0_47 = arith.constant 0 : index
    %c0_48 = arith.constant 0 : index
    %53 = vector.load %arg3[%c0_47, %c0_48] : memref<8x1xf32, #tpu.memory_space<vmem>>, vector<8x1xf32>
    %54 = vector.broadcast %53 : vector<8x1xf32> to vector<8x512xf32>
    %55 = arith.addf %52, %54 : vector<8x512xf32>
    %c0_49 = arith.constant 0 : index
    %c0_50 = arith.constant 0 : index
    %56 = vector.load %arg6[%c0_49, %c0_50] : memref<8x512xf32, #tpu.memory_space<vmem>>, vector<8x512xf32>
    tpu.vector_store %arg6[%c0_49, %c0_50], %55 {strides = array<i32>} : memref<8x512xf32, #tpu.memory_space<vmem>>, vector<8x512xf32>,
    return
  }
  func.func @transform_0(%arg0: i32) -> i32 {
    %c0_i32 = arith.constant 0 : i32
    %c0_i32_0 = arith.constant 0 : i32
    return %c0_i32 : i32
  }
  func.func @transform_1(%arg0: i32) -> (i32, i32, i32) {
    %c0_i32 = arith.constant 0 : i32
    %c0_i32_0 = arith.constant 0 : i32
    %c0_i32_1 = arith.constant 0 : i32
    %c0_i32_2 = arith.constant 0 : i32
    return %c0_i32, %c0_i32_0, %c0_i32_1 : i32, i32, i32
  }
  func.func @transform_2(%arg0: i32) -> (i32, i32) {
    %c0_i32 = arith.constant 0 : i32
    %c0_i32_0 = arith.constant 0 : i32
    %c0_i32_1 = arith.constant 0 : i32
    return %c0_i32, %c0_i32_0 : i32, i32
  }
  func.func @transform_3(%arg0: i32) -> (i32, i32) {
    %c0_i32 = arith.constant 0 : i32
    %c0_i32_0 = arith.constant 0 : i32
    return %c0_i32, %arg0 : i32, i32
  }
  func.func @transform_4(%arg0: i32) -> (i32, i32) {
    %c1_i32 = arith.constant 1 : i32
    %0 = arith.addi %arg0, %c1_i32 : i32
    %c4_i32 = arith.constant 4 : i32
    %1 = arith.muli %0, %c4_i32 : i32
    %c0_i32 = arith.constant 0 : i32
    %c0_i32_0 = arith.constant 0 : i32
    return %c0_i32, %1 : i32, i32
  }
  func.func @transform_5(%arg0: i32) -> (i32, i32) {
    %c0_i32 = arith.constant 0 : i32
    %c0_i32_0 = arith.constant 0 : i32
    return %c0_i32, %arg0 : i32, i32
  }
}

</mosaic_0001>

<llo_original>
// kernel: spectral_conv2d.1
$region0: #{spectral_conv2d.1}
  #allocation0 [shape = 'u32[]', space=smem, size = 0x4, offset = 0x4, fixed_abs, tag = 'smem constant byte address 0x4 - core index']
  #allocation1 [shape = 'u32[144,128]{1,0:T(1,128)}', space=vmem, size = 0x12000, scoped, tag = 'internal scratch']
  #allocation2 [shape = 'f32[4,640]{1,0:T(4,128)}', space=vmem, size = 0x2800, scoped, tag = 'scratch operand']
  #allocation3 [shape = 'f32[1]{0:T(128)S(6)}', space=smem, size = 0x200, scoped, tag = 'scoped memory for spectral_conv2d.1']
  %s0 = inlined_call_operand.<no memory space> [shape: f32[1], index: 0, kind: input, shape index: {}]
  %s1 = inlined_call_operand.vmem [shape: f32[9,8,4], index: 1, kind: input, shape index: {}]
  %s2 = inlined_call_operand.vmem [shape: f32[8,1], index: 2, kind: input, shape index: {}]
  %s3 = inlined_call_operand.vmem [shape: f32[4,1152], index: 3, kind: input, shape index: {}, may-alias: {3,4}]
  %s4 = inlined_call_operand.vmem [shape: f32[4,1152], index: 4, kind: input, shape index: {}, may-alias: {3,4}]
  %s5 = inlined_call_operand.vmem [shape: f32[8,1024], index: 5, kind: output, shape index: {}]
  %s6 = sld [smem:[#allocation0]]
  $region53: #{spectral_conv2d.1} parent=0
    _
  %s8 = ssub.s32 1, %s6
  %s9 = scalar_select 0, %s8, %s6
  %10 = sst [smem:[#allocation3]] %s0
  loop: start=0, step=1, limit=4
  $region2: #{spectral_conv2d.1} parent=0 // loop_pre_header
    _
  $region3: #{spectral_conv2d.1} parent=0 // loop_header
    %s12 = sphi 0, %s16
    %p13 = scmp.ge.s32.totalorder %s12, 4
    %s20 = sphi 0, %s20
    %s22 = sphi 0, %s20
    %s23 = sphi 0, %s22
    %s37 = sphi 0, %s23
    %s41 = sphi 0, %s41
    %s43 = sphi 0, %s41
    %s44 = sphi 0, %s43
    %s58 = sphi 0, %s44
    %s62 = sphi 0, %s62
    %s64 = sphi 0, %s62
    %s65 = sphi 0, %s64
    %s79 = sphi 0, %s65
    %s85 = sphi 0, %s87
    %s88 = sphi 0, %s85
    %s89 = sphi 0, %s88
    %s105 = sphi 0, %s89
    %s115 = sphi 0, %s117
    %s118 = sphi 0, %s115
    %s119 = sphi 0, %s118
    %s135 = sphi 0, %s119
    %s141 = sphi 0, %s143
    %s144 = sphi 0, %s141
    %s145 = sphi 0, %s144
    %s161 = sphi 0, %s145
  $region4: #{spectral_conv2d.1} parent=0 // loop_header_branch
    %15 = sbr.rel (%p13) target = $region8
  $region5: #{spectral_conv2d.1} parent=0 // loop_body
    %s17 = ssub.s32 %s12, 1
    %s18 = ssub.s32 %s12, 2
    %s19 = sadd.s32 %s12, 1
    %s21 = sadd.s32 %s20, 1
    %p24 = scmp.eq.s32.totalorder %s12, 1
    %p25 = scmp.ne.s32.totalorder %s20, %s22
    %p26 = scmp.eq.s32.totalorder %s12, 0
    %p27 = por %p25, %p26
    %p28 = scmp.ne.s32.totalorder %s20, %s22
    %p29 = scmp.eq.s32.totalorder %s17, 1
    %p30 = por %p28, %p29
    %p31 = scmp.ne.s32.totalorder %s22, %s23
    %p32 = scmp.eq.s32.totalorder %s17, 0
    %p33 = por %p31, %p32
    %p34 = scmp.ne.s32.totalorder %s22, %s23
    %p35 = scmp.eq.s32.totalorder %s18, 1
    %p36 = por %p34, %p35
    %p38 = scmp.ne.s32.totalorder %s23, %s37
    %p39 = scmp.eq.s32.totalorder %s18, 0
    %p40 = por %p38, %p39
    %s42 = sadd.s32 %s41, 1
    %p45 = scmp.eq.s32.totalorder %s12, 1
    %p46 = scmp.ne.s32.totalorder %s41, %s43
    %p47 = scmp.eq.s32.totalorder %s12, 0
    %p48 = por %p46, %p47
    %p49 = scmp.ne.s32.totalorder %s41, %s43
    %p50 = scmp.eq.s32.totalorder %s17, 1
    %p51 = por %p49, %p50
    %p52 = scmp.ne.s32.totalorder %s43, %s44
    %p53 = scmp.eq.s32.totalorder %s17, 0
    %p54 = por %p52, %p53
    %p55 = scmp.ne.s32.totalorder %s43, %s44
    %p56 = scmp.eq.s32.totalorder %s18, 1
    %p57 = por %p55, %p56
    %p59 = scmp.ne.s32.totalorder %s44, %s58
    %p60 = scmp.eq.s32.totalorder %s18, 0
    %p61 = por %p59, %p60
    %s63 = sadd.s32 %s62, 1
    %p66 = scmp.eq.s32.totalorder %s12, 1
    %p67 = scmp.ne.s32.totalorder %s62, %s64
    %p68 = scmp.eq.s32.totalorder %s12, 0
    %p69 = por %p67, %p68
    %p70 = scmp.ne.s32.totalorder %s62, %s64
    %p71 = scmp.eq.s32.totalorder %s17, 1
    %p72 = por %p70, %p71
    %p73 = scmp.ne.s32.totalorder %s64, %s65
    %p74 = scmp.eq.s32.totalorder %s17, 0
    %p75 = por %p73, %p74
    %p76 = scmp.ne.s32.totalorder %s64, %s65
    %p77 = scmp.eq.s32.totalorder %s18, 1
    %p78 = por %p76, %p77
    %p80 = scmp.ne.s32.totalorder %s65, %s79
    %p81 = scmp.eq.s32.totalorder %s18, 0
    %p82 = por %p80, %p81
    %s83 = ssub.s32 %s12, %s19
    %p84 = scmp.eq.s32.totalorder %s83, 0
    %s86 = sadd.s32 %s85, 1
    %s87 = scalar_select %p84, %s85, %s86
    %p90 = pneg %p84
    %p91 = scmp.eq.s32.totalorder %s12, 1
    %p92 = por %p90, %p91
    %p93 = scmp.ne.s32.totalorder %s85, %s88
    %p94 = scmp.eq.s32.totalorder %s12, 0
    %p95 = por %p93, %p94
    %p96 = scmp.ne.s32.totalorder %s85, %s88
    %p97 = scmp.eq.s32.totalorder %s17, 1
    %p98 = por %p96, %p97
    %p99 = scmp.ne.s32.totalorder %s88, %s89
    %p100 = scmp.eq.s32.totalorder %s17, 0
    %p101 = por %p99, %p100
    %p102 = scmp.ne.s32.totalorder %s88, %s89
    %p103 = scmp.eq.s32.totalorder %s18, 1
    %p104 = por %p102, %p103
    %p106 = scmp.ne.s32.totalorder %s89, %s105
    %p107 = scmp.eq.s32.totalorder %s18, 0
    %p108 = por %p106, %p107
    %s109 = sadd.s32 %s12, 1
    %s110 = smul.u32 %s109, 4
    %s111 = sadd.s32 %s19, 1
    %s112 = smul.u32 %s111, 4
    %s113 = ssub.s32 %s110, %s112
    %p114 = scmp.eq.s32.totalorder %s113, 0
    %s116 = sadd.s32 %s115, 1
    %s117 = scalar_select %p114, %s115, %s116
    %p120 = pneg %p114
    %p121 = scmp.eq.s32.totalorder %s12, 1
    %p122 = por %p120, %p121
    %p123 = scmp.ne.s32.totalorder %s115, %s118
    %p124 = scmp.eq.s32.totalorder %s12, 0
    %p125 = por %p123, %p124
    %p126 = scmp.ne.s32.totalorder %s115, %s118
    %p127 = scmp.eq.s32.totalorder %s17, 1
    %p128 = por %p126, %p127
    %p129 = scmp.ne.s32.totalorder %s118, %s119
    %p130 = scmp.eq.s32.totalorder %s17, 0
    %p131 = por %p129, %p130
    %p132 = scmp.ne.s32.totalorder %s118, %s119
    %p133 = scmp.eq.s32.totalorder %s18, 1
    %p134 = por %p132, %p133
    %p136 = scmp.ne.s32.totalorder %s119, %s135
    %p137 = scmp.eq.s32.totalorder %s18, 0
    %p138 = por %p136, %p137
    %s139 = ssub.s32 %s12, %s19
    %p140 = scmp.eq.s32.totalorder %s139, 0
    %s142 = sadd.s32 %s141, 1
    %s143 = scalar_select %p140, %s141, %s142
    %p146 = pneg %p140
    %p147 = scmp.eq.s32.totalorder %s12, 1
    %p148 = por %p146, %p147
    %p149 = scmp.ne.s32.totalorder %s141, %s144
    %p150 = scmp.eq.s32.totalorder %s12, 0
    %p151 = por %p149, %p150
    %p152 = scmp.ne.s32.totalorder %s141, %s144
    %p153 = scmp.eq.s32.totalorder %s17, 1
    %p154 = por %p152, %p153
    %p155 = scmp.ne.s32.totalorder %s144, %s145
    %p156 = scmp.eq.s32.totalorder %s17, 0
    %p157 = por %p155, %p156
    %p158 = scmp.ne.s32.totalorder %s144, %s145
    %p159 = scmp.eq.s32.totalorder %s18, 1
    %p160 = por %p158, %p159
    %p162 = scmp.ne.s32.totalorder %s145, %s161
    %p163 = scmp.eq.s32.totalorder %s18, 0
    %p164 = por %p162, %p163
    %p165 = scmp.le.s32.totalorder 1, %s12
    %p166 = scmp.lt.s32.totalorder %s12, 3
    %p167 = pnand %p165, %p166
    %p168 = pneg %p167
    // Predicated region
    $region9: #{spectral_conv2d.1} parent=5 // pred_check
      _
    $region10: #{spectral_conv2d.1} parent=5 // pred_check_branch
      %170 = sbr.rel (%p167) target = $region12
    $region11: #{spectral_conv2d.1} parent=5 // pred_region
      %s171 = ssub.s32 %s12, 1
      // Predicated region
      $region13: #{spectral_conv2d.1} parent=11 // pred_check
        %p172 = pneg %p33
      $region14: #{spectral_conv2d.1} parent=11 // pred_check_branch
        %174 = sbr.rel (%p172) target = $region16
      $region15: #{spectral_conv2d.1} parent=11 // pred_region
        _
      $region16: #{spectral_conv2d.1} parent=11 // pred_fallthru
        _
      // Predicated region
      $region17: #{spectral_conv2d.1} parent=11 // pred_check
        %p175 = pneg %p54
      $region18: #{spectral_conv2d.1} parent=11 // pred_check_branch
        %177 = sbr.rel (%p175) target = $region20
      $region19: #{spectral_conv2d.1} parent=11 // pred_region
        _
      $region20: #{spectral_conv2d.1} parent=11 // pred_fallthru
        _
      // Predicated region
      $region21: #{spectral_conv2d.1} parent=11 // pred_check
        %p178 = pneg %p75
      $region22: #{spectral_conv2d.1} parent=11 // pred_check_branch
        %180 = sbr.rel (%p178) target = $region24
      $region23: #{spectral_conv2d.1} parent=11 // pred_region
        _
      $region24: #{spectral_conv2d.1} parent=11 // pred_fallthru
        _
    $region12: #{spectral_conv2d.1} parent=5 // pred_fallthru
      _
    %p181 = scmp.lt.s32.totalorder %s12, 2
    // Predicated region
    $region25: #{spectral_conv2d.1} parent=5 // pred_check
      %p182 = pneg %p181
    $region26: #{spectral_conv2d.1} parent=5 // pred_check_branch
      %184 = sbr.rel (%p182) target = $region28
    $region27: #{spectral_conv2d.1} parent=5 // pred_region
      // Predicated region
      $region29: #{spectral_conv2d.1} parent=27 // pred_check
        %p185 = pneg %p95
      $region30: #{spectral_conv2d.1} parent=27 // pred_check_branch
        %187 = sbr.rel (%p185) target = $region32
      $region31: #{spectral_conv2d.1} parent=27 // pred_region
        %s188 = smul.u32 4, %s12
        %s189 = ssub.s32 9, %s188
        %p190 = scmp.lt.s32.totalorder %s189, 4
        %s191 = scalar_select %p190, %s189, 4
        %s192 = smul.u32 64, %s191
        %p193 = scmp.lt.s32.totalorder %s188, 8
        %s194 = scalar_select %p193, %s188, 8
        %s195 = smul.addr %s194, 4
        %s196 = scalar_lea.vmem %s3, %s195
        %s197 = smul.u32 4, %s12
        %s198 = ssub.s32 9, %s197
        %p199 = scmp.lt.s32.totalorder %s198, 4
        %s200 = scalar_select %p199, %s198, 4
        %s201 = smul.u32 64, %s200
      $region32: #{spectral_conv2d.1} parent=27 // pred_fallthru
        _
      // Predicated region
      $region33: #{spectral_conv2d.1} parent=27 // pred_check
        %p202 = pneg %p125
      $region34: #{spectral_conv2d.1} parent=27 // pred_check_branch
        %204 = sbr.rel (%p202) target = $region36
      $region35: #{spectral_conv2d.1} parent=27 // pred_region
        %s205 = sadd.s32 %s12, 1
        %s206 = smul.u32 %s205, 4
        %p207 = scmp.lt.s32.totalorder %s206, 8
        %s208 = scalar_select %p207, %s206, 8
        %s209 = smul.addr %s208, 4
        %s210 = scalar_lea.vmem %s4, %s209
        %s211 = sadd.s32 %s12, 1
        %s212 = smul.u32 %s211, 4
      $region36: #{spectral_conv2d.1} parent=27 // pred_fallthru
        _
    $region28: #{spectral_conv2d.1} parent=5 // pred_fallthru
      _
    %p213 = scmp.le.s32.totalorder 1, %s12
    %p214 = scmp.lt.s32.totalorder %s12, 3
    %p215 = pnand %p213, %p214
    %p216 = pneg %p215
    // Predicated region
    $region37: #{spectral_conv2d.1} parent=5 // pred_check
      _
    $region38: #{spectral_conv2d.1} parent=5 // pred_check_branch
      %218 = sbr.rel (%p215) target = $region40
    $region39: #{spectral_conv2d.1} parent=5 // pred_region
      %s219 = ssub.s32 %s12, 1
      %p220 = pneg %p33
      %p221 = pneg %p30
      %p222 = pneg %p54
      %p223 = pneg %p51
      %p224 = pneg %p75
      %p225 = pneg %p72
      %s226 = smul.u32 4, %s17
      %s227 = ssub.s32 9, %s226
      %p228 = scmp.lt.s32.totalorder %s227, 4
      %s229 = scalar_select %p228, %s227, 4
      %s230 = smul.u32 64, %s229
      %p231 = scmp.lt.s32.totalorder %s226, 8
      %s232 = scalar_select %p231, %s226, 8
      %s233 = smul.addr %s232, 4
      %s234 = scalar_lea.vmem %s3, %s233
      %p235 = pneg %p101
      %p236 = pneg %p98
      %s237 = sadd.s32 %s17, 1
      %s238 = smul.u32 %s237, 4
      %p239 = scmp.lt.s32.totalorder %s238, 8
      %s240 = scalar_select %p239, %s238, 8
      %s241 = smul.addr %s240, 4
      %s242 = scalar_lea.vmem %s4, %s241
      %p243 = pneg %p131
      %p244 = pneg %p128
      %p245 = pneg %p157
      %p246 = pneg %p154
      %s247 = smul.u32 4, %s17
      %p248 = scmp.lt.s32.totalorder %s247, 7
      %s249 = scalar_select %p248, %s247, 7
      %s250 = smul.addr %s249, 8
      %s251 = scalar_lea.vmem %s5, %s250
      %s252 = smul.u32 4, %s17
      %s253 = ssub.s32 9, %s252
      %p254 = scmp.lt.s32.totalorder %s253, 4
      %s255 = scalar_select %p254, %s253, 4
      %s256 = smul.u32 64, %s255
      %p257 = scmp.lt.s32.totalorder %s252, 8
      %s258 = scalar_select %p257, %s252, 8
      %s259 = smul.addr %s258, 4
      %s260 = scalar_lea.vmem %s3, %s259
      %s261 = smul.u32 4, %s17
      %s262 = ssub.s32 9, %s261
      %p263 = scmp.lt.s32.totalorder %s262, 4
      %s264 = scalar_select %p263, %s262, 4
      %s265 = smul.u32 64, %s264
      %s266 = sadd.s32 %s17, 1
      %s267 = smul.u32 %s266, 4
      %p268 = scmp.lt.s32.totalorder %s267, 8
      %s269 = scalar_select %p268, %s267, 8
      %s270 = smul.addr %s269, 4
      %s271 = scalar_lea.vmem %s4, %s270
      %s272 = sadd.s32 %s17, 1
      %s273 = smul.u32 %s272, 4
      %s274 = smul.u32 4, %s17
      %p275 = scmp.lt.s32.totalorder %s274, 7
      %s276 = scalar_select %p275, %s274, 7
      %s277 = smul.addr %s276, 8
      %s278 = scalar_lea.vmem %s5, %s277
      %s279 = smul.u32 4, %s17
      %v280 = vld [vmem:[%s260] sm:$0xff]
      %v281 = vld [vmem:[%s260 + $0x8] sm:$0xff]
      %282 = vst [vmem:[#allocation2] sm:$0xff] %v280
      %283 = vst [vmem:[#allocation2 + $0x8] sm:$0xff] %v281
      %v284 = vld [vmem:[%s271] sm:$0xf]
      %285 = vst [vmem:[#allocation2 + $0x10] sm:$0xf] %v284
      %v286 = vld [vmem:[#allocation2] sm:$0xff]
      %v287 = vld [vmem:[#allocation2 + $0x8] sm:$0xff]
      %v288 = vld [vmem:[%s1] sm:$0xff]
      %v289 = vld [vmem:[#allocation2] sm:$0xff]
      %v290 = vld [vmem:[#allocation2 + $0x8] sm:$0xff]
      %v291 = vld [vmem:[#allocation2 + $0x10] sm:$0xf]
      %s292 = scalar_lea.vmem %s1, 8
      %v293 = vld [vmem:[%s292] sm:$0xff]
      %v297 = vcombine.high %v289, %v289
      %v298 = vcombine.high %v290, %v290
      %299 = vrot.lane.b32.xlu0 %v289, 127
      %v300 = vpop.permute.xlu0 %299
      %301 = vrot.lane.b32.xlu0 %v297, 127
      %v302 = vpop.permute.xlu0 %301
      %303 = vrot.lane.b32.xlu0 %v290, 127
      %v304 = vpop.permute.xlu0 %303
      %305 = vrot.lane.b32.xlu0 %v298, 127
      %v306 = vpop.permute.xlu0 %305
      %307 = vrot.lane.b32.xlu0 %v291, 127
      %v308 = vpop.permute.xlu0 %307
      %vm309 = vcmask 1039360
      %v310 = vsel %vm309, %v300, %v302
      %v311 = vsel %vm309, %v302, %v304
      %v312 = vsel %vm309, %v304, %v306
      %v313 = vsel %vm309, %v306, %v308
      %vm314 = vcmask 31744
      %v316 = vsel %vm314, %v293, 0
      %vm318 = vcmask 1043456
      %v319 = vsel %vm318, %v310, 0
      %v321 = vsel %vm318, %v311, 0
      %v323 = vsel %vm318, %v312, 0
      %v325 = vsel %vm318, %v313, 0
      %327 = vmatprep.subr.mxu0 0.0
      %328 = vmatpush1.msra.mxu0 0.0
      %329 = vmatprep.subr.mxu0 0.0
      %330 = vmatpush1.msra.mxu0 0.0
      %331 = vmatprep.subr.mxu0 0.0
      %332 = vmatpush1.msra.mxu0 0.0
      %333 = vmatprep.subr.mxu0 0.0
      %334 = vmatpush1.msra.mxu0 0.0
      %335 = vmatprep.subr.mxu0 0.0
      %336 = vmatpush1.msra.mxu0 0.0
      %337 = vmatprep.subr.mxu0 0.0
      %338 = vmatpush1.msra.mxu0 0.0
      %339 = vmatprep.subr.mxu0 0.0
      %340 = vmatpush1.msra.mxu0 0.0
      %341 = vmatprep.subr.mxu0 0.0
      %342 = vmatpush1.msra.mxu0 0.0
      %343 = vmatprep.subr.mxu0 0.0
      %344 = vmatpush1.msra.mxu0 0.0
      %345 = vmatprep.subr.mxu0 0.0
      %346 = vmatpush1.msra.mxu0 0.0
      %347 = vmatprep.subr.mxu0 0.0
      %348 = vmatpush1.msra.mxu0 0.0
      %349 = vmatprep.subr.mxu0 0.0
      %350 = vmatpush1.msra.mxu0 0.0
      %351 = vmatprep.subr.mxu0 0.0
      %352 = vmatpush1.msra.mxu0 0.0
      %353 = vmatprep.subr.mxu0 0.0
      %354 = vmatpush1.msra.mxu0 0.0
      %355 = vmatprep.subr.mxu0 0.0
      %356 = vmatpush1.msra.mxu0 0.0
      %357 = vmatprep.subr.mxu0 %v321
      %358 = vmatpush1.msra.mxu0 %v319
      %359 = vmatprep.subr.mxu0 0.0
      %360 = vmatpush2.msra.mxu0 0.0
      %361 = vmatprep.subr.mxu0 0.0
      %362 = vmatpush2.msra.mxu0 0.0
      %363 = vmatprep.subr.mxu0 0.0
      %364 = vmatpush2.msra.mxu0 0.0
      %365 = vmatprep.subr.mxu0 0.0
      %366 = vmatpush2.msra.mxu0 0.0
      %367 = vmatprep.subr.mxu0 0.0
      %368 = vmatpush2.msra.mxu0 0.0
      %369 = vmatprep.subr.mxu0 0.0
      %370 = vmatpush2.msra.mxu0 0.0
      %371 = vmatprep.subr.mxu0 0.0
      %372 = vmatpush2.msra.mxu0 0.0
      %373 = vmatprep.subr.mxu0 0.0
      %374 = vmatpush2.msra.mxu0 0.0
      %375 = vmatprep.subr.mxu0 0.0
      %376 = vmatpush2.msra.mxu0 0.0
      %377 = vmatprep.subr.mxu0 0.0
      %378 = vmatpush2.msra.mxu0 0.0
      %379 = vmatprep.subr.mxu0 0.0
      %380 = vmatpush2.msra.mxu0 0.0
      %381 = vmatprep.subr.mxu0 0.0
      %382 = vmatpush2.msra.mxu0 0.0
      %383 = vmatprep.subr.mxu0 0.0
      %384 = vmatpush2.msra.mxu0 0.0
      %385 = vmatprep.subr.mxu0 0.0
      %386 = vmatpush2.msra.mxu0 0.0
      %387 = vmatprep.subr.mxu0 0.0
      %388 = vmatpush2.msra.mxu0 0.0
      %389 = vmatprep.subr.mxu0 0.0
      %390 = vmatpush2.msra.mxu0 0.0
      %391 = vmatprep.mubr.f32.mxu0 0.0
      %392 = vmatmul.mubr.f32.gmra.mxu0 %v316
      %v393 = vpop.f32.mrf.mxu0
      %v394 = vadd.f32 0.0, %v393
      %v395 = vpop.f32.mrf.mxu0
      %v396 = vadd.f32 0.0, %v395
      %397 = vdwg.mxu0
      %398 = vmatprep.subr.mxu0 0.0
      %399 = vmatpush1.msra.mxu0 0.0
      %400 = vmatprep.subr.mxu0 0.0
      %401 = vmatpush1.msra.mxu0 0.0
      %402 = vmatprep.subr.mxu0 0.0
      %403 = vmatpush1.msra.mxu0 0.0
      %404 = vmatprep.subr.mxu0 0.0
      %405 = vmatpush1.msra.mxu0 0.0
      %406 = vmatprep.subr.mxu0 0.0
      %407 = vmatpush1.msra.mxu0 0.0
      %408 = vmatprep.subr.mxu0 0.0
      %409 = vmatpush1.msra.mxu0 0.0
      %410 = vmatprep.subr.mxu0 0.0
      %411 = vmatpush1.msra.mxu0 0.0
      %412 = vmatprep.subr.mxu0 0.0
      %413 = vmatpush1.msra.mxu0 0.0
      %414 = vmatprep.subr.mxu0 0.0
      %415 = vmatpush1.msra.mxu0 0.0
      %416 = vmatprep.subr.mxu0 0.0
      %417 = vmatpush1.msra.mxu0 0.0
      %418 = vmatprep.subr.mxu0 0.0
      %419 = vmatpush1.msra.mxu0 0.0
      %420 = vmatprep.subr.mxu0 0.0
      %421 = vmatpush1.msra.mxu0 0.0
      %422 = vmatprep.subr.mxu0 0.0
      %423 = vmatpush1.msra.mxu0 0.0
      %424 = vmatprep.subr.mxu0 0.0
      %425 = vmatpush1.msra.mxu0 0.0
      %426 = vmatprep.subr.mxu0 0.0
      %427 = vmatpush1.msra.mxu0 0.0
      %428 = vmatprep.subr.mxu0 %v325
      %429 = vmatpush1.msra.mxu0 %v323
      %430 = vmatprep.subr.mxu0 0.0
      %431 = vmatpush2.msra.mxu0 0.0
      %432 = vmatprep.subr.mxu0 0.0
      %433 = vmatpush2.msra.mxu0 0.0
      %434 = vmatprep.subr.mxu0 0.0
      %435 = vmatpush2.msra.mxu0 0.0
      %436 = vmatprep.subr.mxu0 0.0
      %437 = vmatpush2.msra.mxu0 0.0
      %438 = vmatprep.subr.mxu0 0.0
      %439 = vmatpush2.msra.mxu0 0.0
      %440 = vmatprep.subr.mxu0 0.0
      %441 = vmatpush2.msra.mxu0 0.0
      %442 = vmatprep.subr.mxu0 0.0
      %443 = vmatpush2.msra.mxu0 0.0
      %444 = vmatprep.subr.mxu0 0.0
      %445 = vmatpush2.msra.mxu0 0.0
      %446 = vmatprep.subr.mxu0 0.0
      %447 = vmatpush2.msra.mxu0 0.0
      %448 = vmatprep.subr.mxu0 0.0
      %449 = vmatpush2.msra.mxu0 0.0
      %450 = vmatprep.subr.mxu0 0.0
      %451 = vmatpush2.msra.mxu0 0.0
      %452 = vmatprep.subr.mxu0 0.0
      %453 = vmatpush2.msra.mxu0 0.0
      %454 = vmatprep.subr.mxu0 0.0
      %455 = vmatpush2.msra.mxu0 0.0
      %456 = vmatprep.subr.mxu0 0.0
      %457 = vmatpush2.msra.mxu0 0.0
      %458 = vmatprep.subr.mxu0 0.0
      %459 = vmatpush2.msra.mxu0 0.0
      %460 = vmatprep.subr.mxu0 0.0
      %461 = vmatpush2.msra.mxu0 0.0
      %462 = vmatprep.mubr.f32.mxu0 0.0
      %463 = vmatmul.mubr.f32.gmra.mxu0 %v316
      %v464 = vpop.f32.mrf.mxu0
      %v465 = vadd.f32 0.0, %v464
      %v466 = vpop.f32.mrf.mxu0
      %v467 = vadd.f32 0.0, %v466
      %468 = vdwg.mxu0
      %v471 = vcombine.high %v286, %v286
      %v472 = vcombine.high %v287, %v287
      %v474 = vsel %vm314, %v288, 0
      %v476 = vsel %vm318, %v286, 0
      %v478 = vsel %vm318, %v471, 0
      %v480 = vsel %vm318, %v287, 0
      %v482 = vsel %vm318, %v472, 0
      %484 = vmatprep.subr.mxu0 0.0
      %485 = vmatpush1.msra.mxu0 0.0
      %486 = vmatprep.subr.mxu0 0.0
      %487 = vmatpush1.msra.mxu0 0.0
      %488 = vmatprep.subr.mxu0 0.0
      %489 = vmatpush1.msra.mxu0 0.0
      %490 = vmatprep.subr.mxu0 0.0
      %491 = vmatpush1.msra.mxu0 0.0
      %492 = vmatprep.subr.mxu0 0.0
      %493 = vmatpush1.msra.mxu0 0.0
      %494 = vmatprep.subr.mxu0 0.0
      %495 = vmatpush1.msra.mxu0 0.0
      %496 = vmatprep.subr.mxu0 0.0
      %497 = vmatpush1.msra.mxu0 0.0
      %498 = vmatprep.subr.mxu0 0.0
      %499 = vmatpush1.msra.mxu0 0.0
      %500 = vmatprep.subr.mxu0 0.0
      %501 = vmatpush1.msra.mxu0 0.0
      %502 = vmatprep.subr.mxu0 0.0
      %503 = vmatpush1.msra.mxu0 0.0
      %504 = vmatprep.subr.mxu0 0.0
      %505 = vmatpush1.msra.mxu0 0.0
      %506 = vmatprep.subr.mxu0 0.0
      %507 = vmatpush1.msra.mxu0 0.0
      %508 = vmatprep.subr.mxu0 0.0
      %509 = vmatpush1.msra.mxu0 0.0
      %510 = vmatprep.subr.mxu0 0.0
      %511 = vmatpush1.msra.mxu0 0.0
      %512 = vmatprep.subr.mxu0 0.0
      %513 = vmatpush1.msra.mxu0 0.0
      %514 = vmatprep.subr.mxu0 %v478
      %515 = vmatpush1.msra.mxu0 %v476
      %516 = vmatprep.subr.mxu0 0.0
      %517 = vmatpush2.msra.mxu0 0.0
      %518 = vmatprep.subr.mxu0 0.0
      %519 = vmatpush2.msra.mxu0 0.0
      %520 = vmatprep.subr.mxu0 0.0
      %521 = vmatpush2.msra.mxu0 0.0
      %522 = vmatprep.subr.mxu0 0.0
      %523 = vmatpush2.msra.mxu0 0.0
      %524 = vmatprep.subr.mxu0 0.0
      %525 = vmatpush2.msra.mxu0 0.0
      %526 = vmatprep.subr.mxu0 0.0
      %527 = vmatpush2.msra.mxu0 0.0
      %528 = vmatprep.subr.mxu0 0.0
      %529 = vmatpush2.msra.mxu0 0.0
      %530 = vmatprep.subr.mxu0 0.0
      %531 = vmatpush2.msra.mxu0 0.0
      %532 = vmatprep.subr.mxu0 0.0
      %533 = vmatpush2.msra.mxu0 0.0
      %534 = vmatprep.subr.mxu0 0.0
      %535 = vmatpush2.msra.mxu0 0.0
      %536 = vmatprep.subr.mxu0 0.0
      %537 = vmatpush2.msra.mxu0 0.0
      %538 = vmatprep.subr.mxu0 0.0
      %539 = vmatpush2.msra.mxu0 0.0
      %540 = vmatprep.subr.mxu0 0.0
      %541 = vmatpush2.msra.mxu0 0.0
      %542 = vmatprep.subr.mxu0 0.0
      %543 = vmatpush2.msra.mxu0 0.0
      %544 = vmatprep.subr.mxu0 0.0
      %545 = vmatpush2.msra.mxu0 0.0
      %546 = vmatprep.subr.mxu0 0.0
      %547 = vmatpush2.msra.mxu0 0.0
      %548 = vmatprep.mubr.f32.mxu0 0.0
      %549 = vmatmul.mubr.f32.gmra.mxu0 %v474
      %v550 = vpop.f32.mrf.mxu0
      %v551 = vadd.f32 %v394, %v550
      %v552 = vpop.f32.mrf.mxu0
      %v553 = vadd.f32 %v396, %v552
      %554 = vdwg.mxu0
      %555 = vmatprep.subr.mxu0 0.0
      %556 = vmatpush1.msra.mxu0 0.0
      %557 = vmatprep.subr.mxu0 0.0
      %558 = vmatpush1.msra.mxu0 0.0
      %559 = vmatprep.subr.mxu0 0.0
      %560 = vmatpush1.msra.mxu0 0.0
      %561 = vmatprep.subr.mxu0 0.0
      %562 = vmatpush1.msra.mxu0 0.0
      %563 = vmatprep.subr.mxu0 0.0
      %564 = vmatpush1.msra.mxu0 0.0
      %565 = vmatprep.subr.mxu0 0.0
      %566 = vmatpush1.msra.mxu0 0.0
      %567 = vmatprep.subr.mxu0 0.0
      %568 = vmatpush1.msra.mxu0 0.0
      %569 = vmatprep.subr.mxu0 0.0
      %570 = vmatpush1.msra.mxu0 0.0
      %571 = vmatprep.subr.mxu0 0.0
      %572 = vmatpush1.msra.mxu0 0.0
      %573 = vmatprep.subr.mxu0 0.0
      %574 = vmatpush1.msra.mxu0 0.0
      %575 = vmatprep.subr.mxu0 0.0
      %576 = vmatpush1.msra.mxu0 0.0
      %577 = vmatprep.subr.mxu0 0.0
      %578 = vmatpush1.msra.mxu0 0.0
      %579 = vmatprep.subr.mxu0 0.0
      %580 = vmatpush1.msra.mxu0 0.0
      %581 = vmatprep.subr.mxu0 0.0
      %582 = vmatpush1.msra.mxu0 0.0
      %583 = vmatprep.subr.mxu0 0.0
      %584 = vmatpush1.msra.mxu0 0.0
      %585 = vmatprep.subr.mxu0 %v482
      %586 = vmatpush1.msra.mxu0 %v480
      %587 = vmatprep.subr.mxu0 0.0
      %588 = vmatpush2.msra.mxu0 0.0
      %589 = vmatprep.subr.mxu0 0.0
      %590 = vmatpush2.msra.mxu0 0.0
      %591 = vmatprep.subr.mxu0 0.0
      %592 = vmatpush2.msra.mxu0 0.0
      %593 = vmatprep.subr.mxu0 0.0
      %594 = vmatpush2.msra.mxu0 0.0
      %595 = vmatprep.subr.mxu0 0.0
      %596 = vmatpush2.msra.mxu0 0.0
      %597 = vmatprep.subr.mxu0 0.0
      %598 = vmatpush2.msra.mxu0 0.0
      %599 = vmatprep.subr.mxu0 0.0
      %600 = vmatpush2.msra.mxu0 0.0
      %601 = vmatprep.subr.mxu0 0.0
      %602 = vmatpush2.msra.mxu0 0.0
      %603 = vmatprep.subr.mxu0 0.0
      %604 = vmatpush2.msra.mxu0 0.0
      %605 = vmatprep.subr.mxu0 0.0
      %606 = vmatpush2.msra.mxu0 0.0
      %607 = vmatprep.subr.mxu0 0.0
      %608 = vmatpush2.msra.mxu0 0.0
      %609 = vmatprep.subr.mxu0 0.0
      %610 = vmatpush2.msra.mxu0 0.0
      %611 = vmatprep.subr.mxu0 0.0
      %612 = vmatpush2.msra.mxu0 0.0
      %613 = vmatprep.subr.mxu0 0.0
      %614 = vmatpush2.msra.mxu0 0.0
      %615 = vmatprep.subr.mxu0 0.0
      %616 = vmatpush2.msra.mxu0 0.0
      %617 = vmatprep.subr.mxu0 0.0
      %618 = vmatpush2.msra.mxu0 0.0
      %619 = vmatprep.mubr.f32.mxu0 0.0
      %620 = vmatmul.mubr.f32.gmra.mxu0 %v474
      %v621 = vpop.f32.mrf.mxu0
      %v622 = vadd.f32 %v465, %v621
      %v623 = vpop.f32.mrf.mxu0
      %v624 = vadd.f32 %v467, %v623
      %625 = vdwg.mxu0
      %v626 = vld [vmem:[#allocation2] sm:$0xff]
      %v627 = vld [vmem:[#allocation2 + $0x8] sm:$0xff]
      %v628 = vld [vmem:[#allocation2 + $0x10] sm:$0xf]
      %s629 = scalar_lea.vmem %s1, 16
      %v630 = vld [vmem:[%s629] sm:$0xff]
      %v634 = vcombine.high %v626, %v626
      %v635 = vcombine.high %v627, %v627
      %636 = vrot.lane.b32.xlu0 %v626, 126
      %v637 = vpop.permute.xlu0 %636
      %638 = vrot.lane.b32.xlu0 %v634, 126
      %v639 = vpop.permute.xlu0 %638
      %640 = vrot.lane.b32.xlu0 %v627, 126
      %v641 = vpop.permute.xlu0 %640
      %642 = vrot.lane.b32.xlu0 %v635, 126
      %v643 = vpop.permute.xlu0 %642
      %644 = vrot.lane.b32.xlu0 %v628, 126
      %v645 = vpop.permute.xlu0 %644
      %vm646 = vcmask 1031168
      %v647 = vsel %vm646, %v637, %v639
      %v648 = vsel %vm646, %v639, %v641
      %v649 = vsel %vm646, %v641, %v643
      %v650 = vsel %vm646, %v643, %v645
      %v652 = vsel %vm314, %v630, 0
      %v654 = vsel %vm318, %v647, 0
      %v656 = vsel %vm318, %v648, 0
      %v658 = vsel %vm318, %v649, 0
      %v660 = vsel %vm318, %v650, 0
      %662 = vmatprep.subr.mxu0 0.0
      %663 = vmatpush1.msra.mxu0 0.0
      %664 = vmatprep.subr.mxu0 0.0
      %665 = vmatpush1.msra.mxu0 0.0
      %666 = vmatprep.subr.mxu0 0.0
      %667 = vmatpush1.msra.mxu0 0.0
      %668 = vmatprep.subr.mxu0 0.0
      %669 = vmatpush1.msra.mxu0 0.0
      %670 = vmatprep.subr.mxu0 0.0
      %671 = vmatpush1.msra.mxu0 0.0
      %672 = vmatprep.subr.mxu0 0.0
      %673 = vmatpush1.msra.mxu0 0.0
      %674 = vmatprep.subr.mxu0 0.0
      %675 = vmatpush1.msra.mxu0 0.0
      %676 = vmatprep.subr.mxu0 0.0
      %677 = vmatpush1.msra.mxu0 0.0
      %678 = vmatprep.subr.mxu0 0.0
      %679 = vmatpush1.msra.mxu0 0.0
      %680 = vmatprep.subr.mxu0 0.0
      %681 = vmatpush1.msra.mxu0 0.0
      %682 = vmatprep.subr.mxu0 0.0
      %683 = vmatpush1.msra.mxu0 0.0
      %684 = vmatprep.subr.mxu0 0.0
      %685 = vmatpush1.msra.mxu0 0.0
      %686 = vmatprep.subr.mxu0 0.0
      %687 = vmatpush1.msra.mxu0 0.0
      %688 = vmatprep.subr.mxu0 0.0
      %689 = vmatpush1.msra.mxu0 0.0
      %690 = vmatprep.subr.mxu0 0.0
      %691 = vmatpush1.msra.mxu0 0.0
      %692 = vmatprep.subr.mxu0 %v656
      %693 = vmatpush1.msra.mxu0 %v654
      %694 = vmatprep.subr.mxu0 0.0
      %695 = vmatpush2.msra.mxu0 0.0
      %696 = vmatprep.subr.mxu0 0.0
      %697 = vmatpush2.msra.mxu0 0.0
      %698 = vmatprep.subr.mxu0 0.0
      %699 = vmatpush2.msra.mxu0 0.0
      %700 = vmatprep.subr.mxu0 0.0
      %701 = vmatpush2.msra.mxu0 0.0
      %702 = vmatprep.subr.mxu0 0.0
      %703 = vmatpush2.msra.mxu0 0.0
      %704 = vmatprep.subr.mxu0 0.0
      %705 = vmatpush2.msra.mxu0 0.0
      %706 = vmatprep.subr.mxu0 0.0
      %707 = vmatpush2.msra.mxu0 0.0
      %708 = vmatprep.subr.mxu0 0.0
      %709 = vmatpush2.msra.mxu0 0.0
      %710 = vmatprep.subr.mxu0 0.0
      %711 = vmatpush2.msra.mxu0 0.0
      %712 = vmatprep.subr.mxu0 0.0
      %713 = vmatpush2.msra.mxu0 0.0
      %714 = vmatprep.subr.mxu0 0.0
      %715 = vmatpush2.msra.mxu0 0.0
      %716 = vmatprep.subr.mxu0 0.0
      %717 = vmatpush2.msra.mxu0 0.0
      %718 = vmatprep.subr.mxu0 0.0
      %719 = vmatpush2.msra.mxu0 0.0
      %720 = vmatprep.subr.mxu0 0.0
      %721 = vmatpush2.msra.mxu0 0.0
      %722 = vmatprep.subr.mxu0 0.0
      %723 = vmatpush2.msra.mxu0 0.0
      %724 = vmatprep.subr.mxu0 0.0
      %725 = vmatpush2.msra.mxu0 0.0
      %726 = vmatprep.mubr.f32.mxu0 0.0
      %727 = vmatmul.mubr.f32.gmra.mxu0 %v652
      %v728 = vpop.f32.mrf.mxu0
      %v729 = vadd.f32 0.0, %v728
      %v730 = vpop.f32.mrf.mxu0
      %v731 = vadd.f32 0.0, %v730
      %732 = vdwg.mxu0
      %733 = vmatprep.subr.mxu0 0.0
      %734 = vmatpush1.msra.mxu0 0.0
      %735 = vmatprep.subr.mxu0 0.0
      %736 = vmatpush1.msra.mxu0 0.0
      %737 = vmatprep.subr.mxu0 0.0
      %738 = vmatpush1.msra.mxu0 0.0
      %739 = vmatprep.subr.mxu0 0.0
      %740 = vmatpush1.msra.mxu0 0.0
      %741 = vmatprep.subr.mxu0 0.0
      %742 = vmatpush1.msra.mxu0 0.0
      %743 = vmatprep.subr.mxu0 0.0
      %744 = vmatpush1.msra.mxu0 0.0
      %745 = vmatprep.subr.mxu0 0.0
      %746 = vmatpush1.msra.mxu0 0.0
      %747 = vmatprep.subr.mxu0 0.0
      %748 = vmatpush1.msra.mxu0 0.0
      %749 = vmatprep.subr.mxu0 0.0
      %750 = vmatpush1.msra.mxu0 0.0
      %751 = vmatprep.subr.mxu0 0.0
      %752 = vmatpush1.msra.mxu0 0.0
      %753 = vmatprep.subr.mxu0 0.0
      %754 = vmatpush1.msra.mxu0 0.0
      %755 = vmatprep.subr.mxu0 0.0
      %756 = vmatpush1.msra.mxu0 0.0
      %757 = vmatprep.subr.mxu0 0.0
      %758 = vmatpush1.msra.mxu0 0.0
      %759 = vmatprep.subr.mxu0 0.0
      %760 = vmatpush1.msra.mxu0 0.0
      %761 = vmatprep.subr.mxu0 0.0
      %762 = vmatpush1.msra.mxu0 0.0
      %763 = vmatprep.subr.mxu0 %v660
      %764 = vmatpush1.msra.mxu0 %v658
      %765 = vmatprep.subr.mxu0 0.0
      %766 = vmatpush2.msra.mxu0 0.0
      %767 = vmatprep.subr.mxu0 0.0
      %768 = vmatpush2.msra.mxu0 0.0
      %769 = vmatprep.subr.mxu0 0.0
      %770 = vmatpush2.msra.mxu0 0.0
      %771 = vmatprep.subr.mxu0 0.0
      %772 = vmatpush2.msra.mxu0 0.0
      %773 = vmatprep.subr.mxu0 0.0
      %774 = vmatpush2.msra.mxu0 0.0
      %775 = vmatprep.subr.mxu0 0.0
      %776 = vmatpush2.msra.mxu0 0.0
      %777 = vmatprep.subr.mxu0 0.0
      %778 = vmatpush2.msra.mxu0 0.0
      %779 = vmatprep.subr.mxu0 0.0
      %780 = vmatpush2.msra.mxu0 0.0
      %781 = vmatprep.subr.mxu0 0.0
      %782 = vmatpush2.msra.mxu0 0.0
      %783 = vmatprep.subr.mxu0 0.0
      %784 = vmatpush2.msra.mxu0 0.0
      %785 = vmatprep.subr.mxu0 0.0
      %786 = vmatpush2.msra.mxu0 0.0
      %787 = vmatprep.subr.mxu0 0.0
      %788 = vmatpush2.msra.mxu0 0.0
      %789 = vmatprep.subr.mxu0 0.0
      %790 = vmatpush2.msra.mxu0 0.0
      %791 = vmatprep.subr.mxu0 0.0
      %792 = vmatpush2.msra.mxu0 0.0
      %793 = vmatprep.subr.mxu0 0.0
      %794 = vmatpush2.msra.mxu0 0.0
      %795 = vmatprep.subr.mxu0 0.0
      %796 = vmatpush2.msra.mxu0 0.0
      %797 = vmatprep.mubr.f32.mxu0 0.0
      %798 = vmatmul.mubr.f32.gmra.mxu0 %v652
      %v799 = vpop.f32.mrf.mxu0
      %v800 = vadd.f32 0.0, %v799
      %v801 = vpop.f32.mrf.mxu0
      %v802 = vadd.f32 0.0, %v801
      %803 = vdwg.mxu0
      %v804 = vadd.f32 %v551, %v729
      %v805 = vadd.f32 %v553, %v731
      %v806 = vadd.f32 %v622, %v800
      %v807 = vadd.f32 %v624, %v802
      %v808 = vld [vmem:[#allocation2] sm:$0xff]
      %v809 = vld [vmem:[#allocation2 + $0x8] sm:$0xff]
      %v810 = vld [vmem:[#allocation2 + $0x10] sm:$0xf]
      %s811 = scalar_lea.vmem %s1, 24
      %v812 = vld [vmem:[%s811] sm:$0xff]
      %v816 = vcombine.high %v808, %v808
      %v817 = vcombine.high %v809, %v809
      %818 = vrot.lane.b32.xlu0 %v808, 110
      %v819 = vpop.permute.xlu0 %818
      %820 = vrot.lane.b32.xlu0 %v816, 110
      %v821 = vpop.permute.xlu0 %820
      %822 = vrot.lane.b32.xlu0 %v809, 110
      %v823 = vpop.permute.xlu0 %822
      %824 = vrot.lane.b32.xlu0 %v817, 110
      %v825 = vpop.permute.xlu0 %824
      %826 = vrot.lane.b32.xlu0 %v810, 110
      %v827 = vpop.permute.xlu0 %826
      %vm828 = vcmask 900096
      %v829 = vsel %vm828, %v819, %v821
      %v830 = vsel %vm828, %v821, %v823
      %v831 = vsel %vm828, %v823, %v825
      %v832 = vsel %vm828, %v825, %v827
      %v834 = vsel %vm314, %v812, 0
      %v836 = vsel %vm318, %v829, 0
      %v838 = vsel %vm318, %v830, 0
      %v840 = vsel %vm318, %v831, 0
      %v842 = vsel %vm318, %v832, 0
      %844 = vmatprep.subr.mxu0 0.0
      %845 = vmatpush1.msra.mxu0 0.0
      %846 = vmatprep.subr.mxu0 0.0
      %847 = vmatpush1.msra.mxu0 0.0
      %848 = vmatprep.subr.mxu0 0.0
      %849 = vmatpush1.msra.mxu0 0.0
      %850 = vmatprep.subr.mxu0 0.0
      %851 = vmatpush1.msra.mxu0 0.0
      %852 = vmatprep.subr.mxu0 0.0
      %853 = vmatpush1.msra.mxu0 0.0
      %854 = vmatprep.subr.mxu0 0.0
      %855 = vmatpush1.msra.mxu0 0.0
      %856 = vmatprep.subr.mxu0 0.0
      %857 = vmatpush1.msra.mxu0 0.0
      %858 = vmatprep.subr.mxu0 0.0
      %859 = vmatpush1.msra.mxu0 0.0
      %860 = vmatprep.subr.mxu0 0.0
      %861 = vmatpush1.msra.mxu0 0.0
      %862 = vmatprep.subr.mxu0 0.0
      %863 = vmatpush1.msra.mxu0 0.0
      %864 = vmatprep.subr.mxu0 0.0
      %865 = vmatpush1.msra.mxu0 0.0
      %866 = vmatprep.subr.mxu0 0.0
      %867 = vmatpush1.msra.mxu0 0.0
      %868 = vmatprep.subr.mxu0 0.0
      %869 = vmatpush1.msra.mxu0 0.0
      %870 = vmatprep.subr.mxu0 0.0
      %871 = vmatpush1.msra.mxu0 0.0
      %872 = vmatprep.subr.mxu0 0.0
      %873 = vmatpush1.msra.mxu0 0.0
      %874 = vmatprep.subr.mxu0 %v838
      %875 = vmatpush1.msra.mxu0 %v836
      %876 = vmatprep.subr.mxu0 0.0
      %877 = vmatpush2.msra.mxu0 0.0
      %878 = vmatprep.subr.mxu0 0.0
      %879 = vmatpush2.msra.mxu0 0.0
      %880 = vmatprep.subr.mxu0 0.0
      %881 = vmatpush2.msra.mxu0 0.0
      %882 = vmatprep.subr.mxu0 0.0
      %883 = vmatpush2.msra.mxu0 0.0
      %884 = vmatprep.subr.mxu0 0.0
      %885 = vmatpush2.msra.mxu0 0.0
      %886 = vmatprep.subr.mxu0 0.0
      %887 = vmatpush2.msra.mxu0 0.0
      %888 = vmatprep.subr.mxu0 0.0
      %889 = vmatpush2.msra.mxu0 0.0
      %890 = vmatprep.subr.mxu0 0.0
      %891 = vmatpush2.msra.mxu0 0.0
      %892 = vmatprep.subr.mxu0 0.0
      %893 = vmatpush2.msra.mxu0 0.0
      %894 = vmatprep.subr.mxu0 0.0
      %895 = vmatpush2.msra.mxu0 0.0
      %896 = vmatprep.subr.mxu0 0.0
      %897 = vmatpush2.msra.mxu0 0.0
      %898 = vmatprep.subr.mxu0 0.0
      %899 = vmatpush2.msra.mxu0 0.0
      %900 = vmatprep.subr.mxu0 0.0
      %901 = vmatpush2.msra.mxu0 0.0
      %902 = vmatprep.subr.mxu0 0.0
      %903 = vmatpush2.msra.mxu0 0.0
      %904 = vmatprep.subr.mxu0 0.0
      %905 = vmatpush2.msra.mxu0 0.0
      %906 = vmatprep.subr.mxu0 0.0
      %907 = vmatpush2.msra.mxu0 0.0
      %908 = vmatprep.mubr.f32.mxu0 0.0
      %909 = vmatmul.mubr.f32.gmra.mxu0 %v834
      %v910 = vpop.f32.mrf.mxu0
      %v911 = vadd.f32 0.0, %v910
      %v912 = vpop.f32.mrf.mxu0
      %v913 = vadd.f32 0.0, %v912
      %914 = vdwg.mxu0
      %915 = vmatprep.subr.mxu0 0.0
      %916 = vmatpush1.msra.mxu0 0.0
      %917 = vmatprep.subr.mxu0 0.0
      %918 = vmatpush1.msra.mxu0 0.0
      %919 = vmatprep.subr.mxu0 0.0
      %920 = vmatpush1.msra.mxu0 0.0
      %921 = vmatprep.subr.mxu0 0.0
      %922 = vmatpush1.msra.mxu0 0.0
      %923 = vmatprep.subr.mxu0 0.0
      %924 = vmatpush1.msra.mxu0 0.0
      %925 = vmatprep.subr.mxu0 0.0
      %926 = vmatpush1.msra.mxu0 0.0
      %927 = vmatprep.subr.mxu0 0.0
      %928 = vmatpush1.msra.mxu0 0.0
      %929 = vmatprep.subr.mxu0 0.0
      %930 = vmatpush1.msra.mxu0 0.0
      %931 = vmatprep.subr.mxu0 0.0
      %932 = vmatpush1.msra.mxu0 0.0
      %933 = vmatprep.subr.mxu0 0.0
      %934 = vmatpush1.msra.mxu0 0.0
      %935 = vmatprep.subr.mxu0 0.0
      %936 = vmatpush1.msra.mxu0 0.0
      %937 = vmatprep.subr.mxu0 0.0
      %938 = vmatpush1.msra.mxu0 0.0
      %939 = vmatprep.subr.mxu0 0.0
      %940 = vmatpush1.msra.mxu0 0.0
      %941 = vmatprep.subr.mxu0 0.0
      %942 = vmatpush1.msra.mxu0 0.0
      %943 = vmatprep.subr.mxu0 0.0
      %944 = vmatpush1.msra.mxu0 0.0
      %945 = vmatprep.subr.mxu0 %v842
      %946 = vmatpush1.msra.mxu0 %v840
      %947 = vmatprep.subr.mxu0 0.0
      %948 = vmatpush2.msra.mxu0 0.0
      %949 = vmatprep.subr.mxu0 0.0
      %950 = vmatpush2.msra.mxu0 0.0
      %951 = vmatprep.subr.mxu0 0.0
      %952 = vmatpush2.msra.mxu0 0.0
      %953 = vmatprep.subr.mxu0 0.0
      %954 = vmatpush2.msra.mxu0 0.0
      %955 = vmatprep.subr.mxu0 0.0
      %956 = vmatpush2.msra.mxu0 0.0
      %957 = vmatprep.subr.mxu0 0.0
      %958 = vmatpush2.msra.mxu0 0.0
      %959 = vmatprep.subr.mxu0 0.0
      %960 = vmatpush2.msra.mxu0 0.0
      %961 = vmatprep.subr.mxu0 0.0
      %962 = vmatpush2.msra.mxu0 0.0
      %963 = vmatprep.subr.mxu0 0.0
      %964 = vmatpush2.msra.mxu0 0.0
      %965 = vmatprep.subr.mxu0 0.0
      %966 = vmatpush2.msra.mxu0 0.0
      %967 = vmatprep.subr.mxu0 0.0
      %968 = vmatpush2.msra.mxu0 0.0
      %969 = vmatprep.subr.mxu0 0.0
      %970 = vmatpush2.msra.mxu0 0.0
      %971 = vmatprep.subr.mxu0 0.0
      %972 = vmatpush2.msra.mxu0 0.0
      %973 = vmatprep.subr.mxu0 0.0
      %974 = vmatpush2.msra.mxu0 0.0
      %975 = vmatprep.subr.mxu0 0.0
      %976 = vmatpush2.msra.mxu0 0.0
      %977 = vmatprep.subr.mxu0 0.0
      %978 = vmatpush2.msra.mxu0 0.0
      %979 = vmatprep.mubr.f32.mxu0 0.0
      %980 = vmatmul.mubr.f32.gmra.mxu0 %v834
      %v981 = vpop.f32.mrf.mxu0
      %v982 = vadd.f32 0.0, %v981
      %v983 = vpop.f32.mrf.mxu0
      %v984 = vadd.f32 0.0, %v983
      %985 = vdwg.mxu0
      %v986 = vadd.f32 %v804, %v911
      %v987 = vadd.f32 %v805, %v913
      %v988 = vadd.f32 %v806, %v982
      %v989 = vadd.f32 %v807, %v984
      %v990 = vld [vmem:[#allocation2] sm:$0xff]
      %v991 = vld [vmem:[#allocation2 + $0x8] sm:$0xff]
      %v992 = vld [vmem:[#allocation2 + $0x10] sm:$0xf]
      %s993 = scalar_lea.vmem %s1, 32
      %v994 = vld [vmem:[%s993] sm:$0xff]
      %v998 = vcombine.high %v990, %v990
      %v999 = vcombine.high %v991, %v991
      %1000 = vrot.lane.b32.xlu0 %v990, 109
      %v1001 = vpop.permute.xlu0 %1000
      %1002 = vrot.lane.b32.xlu0 %v998, 109
      %v1003 = vpop.permute.xlu0 %1002
      %1004 = vrot.lane.b32.xlu0 %v991, 109
      %v1005 = vpop.permute.xlu0 %1004
      %1006 = vrot.lane.b32.xlu0 %v999, 109
      %v1007 = vpop.permute.xlu0 %1006
      %1008 = vrot.lane.b32.xlu0 %v992, 109
      %v1009 = vpop.permute.xlu0 %1008
      %vm1010 = vcmask 891904
      %v1011 = vsel %vm1010, %v1001, %v1003
      %v1012 = vsel %vm1010, %v1003, %v1005
      %v1013 = vsel %vm1010, %v1005, %v1007
      %v1014 = vsel %vm1010, %v1007, %v1009
      %v1016 = vsel %vm314, %v994, 0
      %v1018 = vsel %vm318, %v1011, 0
      %v1020 = vsel %vm318, %v1012, 0
      %v1022 = vsel %vm318, %v1013, 0
      %v1024 = vsel %vm318, %v1014, 0
      %1026 = vmatprep.subr.mxu0 0.0
      %1027 = vmatpush1.msra.mxu0 0.0
      %1028 = vmatprep.subr.mxu0 0.0
      %1029 = vmatpush1.msra.mxu0 0.0
      %1030 = vmatprep.subr.mxu0 0.0
      %1031 = vmatpush1.msra.mxu0 0.0
      %1032 = vmatprep.subr.mxu0 0.0
      %1033 = vmatpush1.msra.mxu0 0.0
      %1034 = vmatprep.subr.mxu0 0.0
      %1035 = vmatpush1.msra.mxu0 0.0
      %1036 = vmatprep.subr.mxu0 0.0
      %1037 = vmatpush1.msra.mxu0 0.0
      %1038 = vmatprep.subr.mxu0 0.0
      %1039 = vmatpush1.msra.mxu0 0.0
      %1040 = vmatprep.subr.mxu0 0.0
      %1041 = vmatpush1.msra.mxu0 0.0
      %1042 = vmatprep.subr.mxu0 0.0
      %1043 = vmatpush1.msra.mxu0 0.0
      %1044 = vmatprep.subr.mxu0 0.0
      %1045 = vmatpush1.msra.mxu0 0.0
      %1046 = vmatprep.subr.mxu0 0.0
      %1047 = vmatpush1.msra.mxu0 0.0
      %1048 = vmatprep.subr.mxu0 0.0
      %1049 = vmatpush1.msra.mxu0 0.0
      %1050 = vmatprep.subr.mxu0 0.0
      %1051 = vmatpush1.msra.mxu0 0.0
      %1052 = vmatprep.subr.mxu0 0.0
      %1053 = vmatpush1.msra.mxu0 0.0
      %1054 = vmatprep.subr.mxu0 0.0
      %1055 = vmatpush1.msra.mxu0 0.0
      %1056 = vmatprep.subr.mxu0 %v1020
      %1057 = vmatpush1.msra.mxu0 %v1018
      %1058 = vmatprep.subr.mxu0 0.0
      %1059 = vmatpush2.msra.mxu0 0.0
      %1060 = vmatprep.subr.mxu0 0.0
      %1061 = vmatpush2.msra.mxu0 0.0
      %1062 = vmatprep.subr.mxu0 0.0
      %1063 = vmatpush2.msra.mxu0 0.0
      %1064 = vmatprep.subr.mxu0 0.0
      %1065 = vmatpush2.msra.mxu0 0.0
      %1066 = vmatprep.subr.mxu0 0.0
      %1067 = vmatpush2.msra.mxu0 0.0
      %1068 = vmatprep.subr.mxu0 0.0
      %1069 = vmatpush2.msra.mxu0 0.0
      %1070 = vmatprep.subr.mxu0 0.0
      %1071 = vmatpush2.msra.mxu0 0.0
      %1072 = vmatprep.subr.mxu0 0.0
      %1073 = vmatpush2.msra.mxu0 0.0
      %1074 = vmatprep.subr.mxu0 0.0
      %1075 = vmatpush2.msra.mxu0 0.0
      %1076 = vmatprep.subr.mxu0 0.0
      %1077 = vmatpush2.msra.mxu0 0.0
      %1078 = vmatprep.subr.mxu0 0.0
      %1079 = vmatpush2.msra.mxu0 0.0
      %1080 = vmatprep.subr.mxu0 0.0
      %1081 = vmatpush2.msra.mxu0 0.0
      %1082 = vmatprep.subr.mxu0 0.0
      %1083 = vmatpush2.msra.mxu0 0.0
      %1084 = vmatprep.subr.mxu0 0.0
      %1085 = vmatpush2.msra.mxu0 0.0
      %1086 = vmatprep.subr.mxu0 0.0
      %1087 = vmatpush2.msra.mxu0 0.0
      %1088 = vmatprep.subr.mxu0 0.0
      %1089 = vmatpush2.msra.mxu0 0.0
      %1090 = vmatprep.mubr.f32.mxu0 0.0
      %1091 = vmatmul.mubr.f32.gmra.mxu0 %v1016
      %v1092 = vpop.f32.mrf.mxu0
      %v1093 = vadd.f32 0.0, %v1092
      %v1094 = vpop.f32.mrf.mxu0
      %v1095 = vadd.f32 0.0, %v1094
      %1096 = vdwg.mxu0
      %1097 = vmatprep.subr.mxu0 0.0
      %1098 = vmatpush1.msra.mxu0 0.0
      %1099 = vmatprep.subr.mxu0 0.0
      %1100 = vmatpush1.msra.mxu0 0.0
      %1101 = vmatprep.subr.mxu0 0.0
      %1102 = vmatpush1.msra.mxu0 0.0
      %1103 = vmatprep.subr.mxu0 0.0
      %1104 = vmatpush1.msra.mxu0 0.0
      %1105 = vmatprep.subr.mxu0 0.0
      %1106 = vmatpush1.msra.mxu0 0.0
      %1107 = vmatprep.subr.mxu0 0.0
      %1108 = vmatpush1.msra.mxu0 0.0
      %1109 = vmatprep.subr.mxu0 0.0
      %1110 = vmatpush1.msra.mxu0 0.0
      %1111 = vmatprep.subr.mxu0 0.0
      %1112 = vmatpush1.msra.mxu0 0.0
      %1113 = vmatprep.subr.mxu0 0.0
      %1114 = vmatpush1.msra.mxu0 0.0
      %1115 = vmatprep.subr.mxu0 0.0
      %1116 = vmatpush1.msra.mxu0 0.0
      %1117 = vmatprep.subr.mxu0 0.0
      %1118 = vmatpush1.msra.mxu0 0.0
      %1119 = vmatprep.subr.mxu0 0.0
      %1120 = vmatpush1.msra.mxu0 0.0
      %1121 = vmatprep.subr.mxu0 0.0
      %1122 = vmatpush1.msra.mxu0 0.0
      %1123 = vmatprep.subr.mxu0 0.0
      %1124 = vmatpush1.msra.mxu0 0.0
      %1125 = vmatprep.subr.mxu0 0.0
      %1126 = vmatpush1.msra.mxu0 0.0
      %1127 = vmatprep.subr.mxu0 %v1024
      %1128 = vmatpush1.msra.mxu0 %v1022
      %1129 = vmatprep.subr.mxu0 0.0
      %1130 = vmatpush2.msra.mxu0 0.0
      %1131 = vmatprep.subr.mxu0 0.0
      %1132 = vmatpush2.msra.mxu0 0.0
      %1133 = vmatprep.subr.mxu0 0.0
      %1134 = vmatpush2.msra.mxu0 0.0
      %1135 = vmatprep.subr.mxu0 0.0
      %1136 = vmatpush2.msra.mxu0 0.0
      %1137 = vmatprep.subr.mxu0 0.0
      %1138 = vmatpush2.msra.mxu0 0.0
      %1139 = vmatprep.subr.mxu0 0.0
      %1140 = vmatpush2.msra.mxu0 0.0
      %1141 = vmatprep.subr.mxu0 0.0
      %1142 = vmatpush2.msra.mxu0 0.0
      %1143 = vmatprep.subr.mxu0 0.0
      %1144 = vmatpush2.msra.mxu0 0.0
      %1145 = vmatprep.subr.mxu0 0.0
      %1146 = vmatpush2.msra.mxu0 0.0
      %1147 = vmatprep.subr.mxu0 0.0
      %1148 = vmatpush2.msra.mxu0 0.0
      %1149 = vmatprep.subr.mxu0 0.0
      %1150 = vmatpush2.msra.mxu0 0.0
      %1151 = vmatprep.subr.mxu0 0.0
      %1152 = vmatpush2.msra.mxu0 0.0
      %1153 = vmatprep.subr.mxu0 0.0
      %1154 = vmatpush2.msra.mxu0 0.0
      %1155 = vmatprep.subr.mxu0 0.0
      %1156 = vmatpush2.msra.mxu0 0.0
      %1157 = vmatprep.subr.mxu0 0.0
      %1158 = vmatpush2.msra.mxu0 0.0
      %1159 = vmatprep.subr.mxu0 0.0
      %1160 = vmatpush2.msra.mxu0 0.0
      %1161 = vmatprep.mubr.f32.mxu0 0.0
      %1162 = vmatmul.mubr.f32.gmra.mxu0 %v1016
      %v1163 = vpop.f32.mrf.mxu0
      %v1164 = vadd.f32 0.0, %v1163
      %v1165 = vpop.f32.mrf.mxu0
      %v1166 = vadd.f32 0.0, %v1165
      %1167 = vdwg.mxu0
      %v1168 = vadd.f32 %v986, %v1093
      %v1169 = vadd.f32 %v987, %v1095
      %v1170 = vadd.f32 %v988, %v1164
      %v1171 = vadd.f32 %v989, %v1166
      %v1172 = vld [vmem:[#allocation2] sm:$0xff]
      %v1173 = vld [vmem:[#allocation2 + $0x8] sm:$0xff]
      %v1174 = vld [vmem:[#allocation2 + $0x10] sm:$0xf]
      %s1175 = scalar_lea.vmem %s1, 40
      %v1176 = vld [vmem:[%s1175] sm:$0xff]
      %v1180 = vcombine.high %v1172, %v1172
      %v1181 = vcombine.high %v1173, %v1173
      %1182 = vrot.lane.b32.xlu0 %v1172, 108
      %v1183 = vpop.permute.xlu0 %1182
      %1184 = vrot.lane.b32.xlu0 %v1180, 108
      %v1185 = vpop.permute.xlu0 %1184
      %1186 = vrot.lane.b32.xlu0 %v1173, 108
      %v1187 = vpop.permute.xlu0 %1186
      %1188 = vrot.lane.b32.xlu0 %v1181, 108
      %v1189 = vpop.permute.xlu0 %1188
      %1190 = vrot.lane.b32.xlu0 %v1174, 108
      %v1191 = vpop.permute.xlu0 %1190
      %vm1192 = vcmask 883712
      %v1193 = vsel %vm1192, %v1183, %v1185
      %v1194 = vsel %vm1192, %v1185, %v1187
      %v1195 = vsel %vm1192, %v1187, %v1189
      %v1196 = vsel %vm1192, %v1189, %v1191
      %v1198 = vsel %vm314, %v1176, 0
      %v1200 = vsel %vm318, %v1193, 0
      %v1202 = vsel %vm318, %v1194, 0
      %v1204 = vsel %vm318, %v1195, 0
      %v1206 = vsel %vm318, %v1196, 0
      %1208 = vmatprep.subr.mxu0 0.0
      %1209 = vmatpush1.msra.mxu0 0.0
      %1210 = vmatprep.subr.mxu0 0.0
      %1211 = vmatpush1.msra.mxu0 0.0
      %1212 = vmatprep.subr.mxu0 0.0
      %1213 = vmatpush1.msra.mxu0 0.0
      %1214 = vmatprep.subr.mxu0 0.0
      %1215 = vmatpush1.msra.mxu0 0.0
      %1216 = vmatprep.subr.mxu0 0.0
      %1217 = vmatpush1.msra.mxu0 0.0
      %1218 = vmatprep.subr.mxu0 0.0
      %1219 = vmatpush1.msra.mxu0 0.0
      %1220 = vmatprep.subr.mxu0 0.0
      %1221 = vmatpush1.msra.mxu0 0.0
      %1222 = vmatprep.subr.mxu0 0.0
      %1223 = vmatpush1.msra.mxu0 0.0
      %1224 = vmatprep.subr.mxu0 0.0
      %1225 = vmatpush1.msra.mxu0 0.0
      %1226 = vmatprep.subr.mxu0 0.0
      %1227 = vmatpush1.msra.mxu0 0.0
      %1228 = vmatprep.subr.mxu0 0.0
      %1229 = vmatpush1.msra.mxu0 0.0
      %1230 = vmatprep.subr.mxu0 0.0
      %1231 = vmatpush1.msra.mxu0 0.0
      %1232 = vmatprep.subr.mxu0 0.0
      %1233 = vmatpush1.msra.mxu0 0.0
      %1234 = vmatprep.subr.mxu0 0.0
      %1235 = vmatpush1.msra.mxu0 0.0
      %1236 = vmatprep.subr.mxu0 0.0
      %1237 = vmatpush1.msra.mxu0 0.0
      %1238 = vmatprep.subr.mxu0 %v1202
      %1239 = vmatpush1.msra.mxu0 %v1200
      %1240 = vmatprep.subr.mxu0 0.0
      %1241 = vmatpush2.msra.mxu0 0.0
      %1242 = vmatprep.subr.mxu0 0.0
      %1243 = vmatpush2.msra.mxu0 0.0
      %1244 = vmatprep.subr.mxu0 0.0
      %1245 = vmatpush2.msra.mxu0 0.0
      %1246 = vmatprep.subr.mxu0 0.0
      %1247 = vmatpush2.msra.mxu0 0.0
      %1248 = vmatprep.subr.mxu0 0.0
      %1249 = vmatpush2.msra.mxu0 0.0
      %1250 = vmatprep.subr.mxu0 0.0
      %1251 = vmatpush2.msra.mxu0 0.0
      %1252 = vmatprep.subr.mxu0 0.0
      %1253 = vmatpush2.msra.mxu0 0.0
      %1254 = vmatprep.subr.mxu0 0.0
      %1255 = vmatpush2.msra.mxu0 0.0
      %1256 = vmatprep.subr.mxu0 0.0
      %1257 = vmatpush2.msra.mxu0 0.0
      %1258 = vmatprep.subr.mxu0 0.0
      %1259 = vmatpush2.msra.mxu0 0.0
      %1260 = vmatprep.subr.mxu0 0.0
      %1261 = vmatpush2.msra.mxu0 0.0
      %1262 = vmatprep.subr.mxu0 0.0
      %1263 = vmatpush2.msra.mxu0 0.0
      %1264 = vmatprep.subr.mxu0 0.0
      %1265 = vmatpush2.msra.mxu0 0.0
      %1266 = vmatprep.subr.mxu0 0.0
      %1267 = vmatpush2.msra.mxu0 0.0
      %1268 = vmatprep.subr.mxu0 0.0
      %1269 = vmatpush2.msra.mxu0 0.0
      %1270 = vmatprep.subr.mxu0 0.0
      %1271 = vmatpush2.msra.mxu0 0.0
      %1272 = vmatprep.mubr.f32.mxu0 0.0
      %1273 = vmatmul.mubr.f32.gmra.mxu0 %v1198
      %v1274 = vpop.f32.mrf.mxu0
      %v1275 = vadd.f32 0.0, %v1274
      %v1276 = vpop.f32.mrf.mxu0
      %v1277 = vadd.f32 0.0, %v1276
      %1278 = vdwg.mxu0
      %1279 = vmatprep.subr.mxu0 0.0
      %1280 = vmatpush1.msra.mxu0 0.0
      %1281 = vmatprep.subr.mxu0 0.0
      %1282 = vmatpush1.msra.mxu0 0.0
      %1283 = vmatprep.subr.mxu0 0.0
      %1284 = vmatpush1.msra.mxu0 0.0
      %1285 = vmatprep.subr.mxu0 0.0
      %1286 = vmatpush1.msra.mxu0 0.0
      %1287 = vmatprep.subr.mxu0 0.0
      %1288 = vmatpush1.msra.mxu0 0.0
      %1289 = vmatprep.subr.mxu0 0.0
      %1290 = vmatpush1.msra.mxu0 0.0
      %1291 = vmatprep.subr.mxu0 0.0
      %1292 = vmatpush1.msra.mxu0 0.0
      %1293 = vmatprep.subr.mxu0 0.0
      %1294 = vmatpush1.msra.mxu0 0.0
      %1295 = vmatprep.subr.mxu0 0.0
      %1296 = vmatpush1.msra.mxu0 0.0
      %1297 = vmatprep.subr.mxu0 0.0
      %1298 = vmatpush1.msra.mxu0 0.0
      %1299 = vmatprep.subr.mxu0 0.0
      %1300 = vmatpush1.msra.mxu0 0.0
      %1301 = vmatprep.subr.mxu0 0.0
      %1302 = vmatpush1.msra.mxu0 0.0
      %1303 = vmatprep.subr.mxu0 0.0
      %1304 = vmatpush1.msra.mxu0 0.0
      %1305 = vmatprep.subr.mxu0 0.0
      %1306 = vmatpush1.msra.mxu0 0.0
      %1307 = vmatprep.subr.mxu0 0.0
      %1308 = vmatpush1.msra.mxu0 0.0
      %1309 = vmatprep.subr.mxu0 %v1206
      %1310 = vmatpush1.msra.mxu0 %v1204
      %1311 = vmatprep.subr.mxu0 0.0
      %1312 = vmatpush2.msra.mxu0 0.0
      %1313 = vmatprep.subr.mxu0 0.0
      %1314 = vmatpush2.msra.mxu0 0.0
      %1315 = vmatprep.subr.mxu0 0.0
      %1316 = vmatpush2.msra.mxu0 0.0
      %1317 = vmatprep.subr.mxu0 0.0
      %1318 = vmatpush2.msra.mxu0 0.0
      %1319 = vmatprep.subr.mxu0 0.0
      %1320 = vmatpush2.msra.mxu0 0.0
      %1321 = vmatprep.subr.mxu0 0.0
      %1322 = vmatpush2.msra.mxu0 0.0
      %1323 = vmatprep.subr.mxu0 0.0
      %1324 = vmatpush2.msra.mxu0 0.0
      %1325 = vmatprep.subr.mxu0 0.0
      %1326 = vmatpush2.msra.mxu0 0.0
      %1327 = vmatprep.subr.mxu0 0.0
      %1328 = vmatpush2.msra.mxu0 0.0
      %1329 = vmatprep.subr.mxu0 0.0
      %1330 = vmatpush2.msra.mxu0 0.0
      %1331 = vmatprep.subr.mxu0 0.0
      %1332 = vmatpush2.msra.mxu0 0.0
      %1333 = vmatprep.subr.mxu0 0.0
      %1334 = vmatpush2.msra.mxu0 0.0
      %1335 = vmatprep.subr.mxu0 0.0
      %1336 = vmatpush2.msra.mxu0 0.0
      %1337 = vmatprep.subr.mxu0 0.0
      %1338 = vmatpush2.msra.mxu0 0.0
      %1339 = vmatprep.subr.mxu0 0.0
      %1340 = vmatpush2.msra.mxu0 0.0
      %1341 = vmatprep.subr.mxu0 0.0
      %1342 = vmatpush2.msra.mxu0 0.0
      %1343 = vmatprep.mubr.f32.mxu0 0.0
      %1344 = vmatmul.mubr.f32.gmra.mxu0 %v1198
      %v1345 = vpop.f32.mrf.mxu0
      %v1346 = vadd.f32 0.0, %v1345
      %v1347 = vpop.f32.mrf.mxu0
      %v1348 = vadd.f32 0.0, %v1347
      %1349 = vdwg.mxu0
      %v1350 = vadd.f32 %v1168, %v1275
      %v1351 = vadd.f32 %v1169, %v1277
      %v1352 = vadd.f32 %v1170, %v1346
      %v1353 = vadd.f32 %v1171, %v1348
      %v1354 = vld [vmem:[#allocation2] sm:$0xff]
      %v1355 = vld [vmem:[#allocation2 + $0x8] sm:$0xff]
      %v1356 = vld [vmem:[#allocation2 + $0x10] sm:$0xf]
      %s1357 = scalar_lea.vmem %s1, 48
      %v1358 = vld [vmem:[%s1357] sm:$0xff]
      %v1362 = vcombine.high %v1354, %v1354
      %v1363 = vcombine.high %v1355, %v1355
      %1364 = vrot.lane.b32.xlu0 %v1354, 92
      %v1365 = vpop.permute.xlu0 %1364
      %1366 = vrot.lane.b32.xlu0 %v1362, 92
      %v1367 = vpop.permute.xlu0 %1366
      %1368 = vrot.lane.b32.xlu0 %v1355, 92
      %v1369 = vpop.permute.xlu0 %1368
      %1370 = vrot.lane.b32.xlu0 %v1363, 92
      %v1371 = vpop.permute.xlu0 %1370
      %1372 = vrot.lane.b32.xlu0 %v1356, 92
      %v1373 = vpop.permute.xlu0 %1372
      %vm1374 = vcmask 752640
      %v1375 = vsel %vm1374, %v1365, %v1367
      %v1376 = vsel %vm1374, %v1367, %v1369
      %v1377 = vsel %vm1374, %v1369, %v1371
      %v1378 = vsel %vm1374, %v1371, %v1373
      %v1380 = vsel %vm314, %v1358, 0
      %v1382 = vsel %vm318, %v1375, 0
      %v1384 = vsel %vm318, %v1376, 0
      %v1386 = vsel %vm318, %v1377, 0
      %v1388 = vsel %vm318, %v1378, 0
      %1390 = vmatprep.subr.mxu0 0.0
      %1391 = vmatpush1.msra.mxu0 0.0
      %1392 = vmatprep.subr.mxu0 0.0
      %1393 = vmatpush1.msra.mxu0 0.0
      %1394 = vmatprep.subr.mxu0 0.0
      %1395 = vmatpush1.msra.mxu0 0.0
      %1396 = vmatprep.subr.mxu0 0.0
      %1397 = vmatpush1.msra.mxu0 0.0
      %1398 = vmatprep.subr.mxu0 0.0
      %1399 = vmatpush1.msra.mxu0 0.0
      %1400 = vmatprep.subr.mxu0 0.0
      %1401 = vmatpush1.msra.mxu0 0.0
      %1402 = vmatprep.subr.mxu0 0.0
      %1403 = vmatpush1.msra.mxu0 0.0
      %1404 = vmatprep.subr.mxu0 0.0
      %1405 = vmatpush1.msra.mxu0 0.0
      %1406 = vmatprep.subr.mxu0 0.0
      %1407 = vmatpush1.msra.mxu0 0.0
      %1408 = vmatprep.subr.mxu0 0.0
      %1409 = vmatpush1.msra.mxu0 0.0
      %1410 = vmatprep.subr.mxu0 0.0
      %1411 = vmatpush1.msra.mxu0 0.0
      %1412 = vmatprep.subr.mxu0 0.0
      %1413 = vmatpush1.msra.mxu0 0.0
      %1414 = vmatprep.subr.mxu0 0.0
      %1415 = vmatpush1.msra.mxu0 0.0
      %1416 = vmatprep.subr.mxu0 0.0
      %1417 = vmatpush1.msra.mxu0 0.0
      %1418 = vmatprep.subr.mxu0 0.0
      %1419 = vmatpush1.msra.mxu0 0.0
      %1420 = vmatprep.subr.mxu0 %v1384
      %1421 = vmatpush1.msra.mxu0 %v1382
      %1422 = vmatprep.subr.mxu0 0.0
      %1423 = vmatpush2.msra.mxu0 0.0
      %1424 = vmatprep.subr.mxu0 0.0
      %1425 = vmatpush2.msra.mxu0 0.0
      %1426 = vmatprep.subr.mxu0 0.0
      %1427 = vmatpush2.msra.mxu0 0.0
      %1428 = vmatprep.subr.mxu0 0.0
      %1429 = vmatpush2.msra.mxu0 0.0
      %1430 = vmatprep.subr.mxu0 0.0
      %1431 = vmatpush2.msra.mxu0 0.0
      %1432 = vmatprep.subr.mxu0 0.0
      %1433 = vmatpush2.msra.mxu0 0.0
      %1434 = vmatprep.subr.mxu0 0.0
      %1435 = vmatpush2.msra.mxu0 0.0
      %1436 = vmatprep.subr.mxu0 0.0
      %1437 = vmatpush2.msra.mxu0 0.0
      %1438 = vmatprep.subr.mxu0 0.0
      %1439 = vmatpush2.msra.mxu0 0.0
      %1440 = vmatprep.subr.mxu0 0.0
      %1441 = vmatpush2.msra.mxu0 0.0
      %1442 = vmatprep.subr.mxu0 0.0
      %1443 = vmatpush2.msra.mxu0 0.0
      %1444 = vmatprep.subr.mxu0 0.0
      %1445 = vmatpush2.msra.mxu0 0.0
      %1446 = vmatprep.subr.mxu0 0.0
      %1447 = vmatpush2.msra.mxu0 0.0
      %1448 = vmatprep.subr.mxu0 0.0
      %1449 = vmatpush2.msra.mxu0 0.0
      %1450 = vmatprep.subr.mxu0 0.0
      %1451 = vmatpush2.msra.mxu0 0.0
      %1452 = vmatprep.subr.mxu0 0.0
      %1453 = vmatpush2.msra.mxu0 0.0
      %1454 = vmatprep.mubr.f32.mxu0 0.0
      %1455 = vmatmul.mubr.f32.gmra.mxu0 %v1380
      %v1456 = vpop.f32.mrf.mxu0
      %v1457 = vadd.f32 0.0, %v1456
      %v1458 = vpop.f32.mrf.mxu0
      %v1459 = vadd.f32 0.0, %v1458
      %1460 = vdwg.mxu0
      %1461 = vmatprep.subr.mxu0 0.0
      %1462 = vmatpush1.msra.mxu0 0.0
      %1463 = vmatprep.subr.mxu0 0.0
      %1464 = vmatpush1.msra.mxu0 0.0
      %1465 = vmatprep.subr.mxu0 0.0
      %1466 = vmatpush1.msra.mxu0 0.0
      %1467 = vmatprep.subr.mxu0 0.0
      %1468 = vmatpush1.msra.mxu0 0.0
      %1469 = vmatprep.subr.mxu0 0.0
      %1470 = vmatpush1.msra.mxu0 0.0
      %1471 = vmatprep.subr.mxu0 0.0
      %1472 = vmatpush1.msra.mxu0 0.0
      %1473 = vmatprep.subr.mxu0 0.0
      %1474 = vmatpush1.msra.mxu0 0.0
      %1475 = vmatprep.subr.mxu0 0.0
      %1476 = vmatpush1.msra.mxu0 0.0
      %1477 = vmatprep.subr.mxu0 0.0
      %1478 = vmatpush1.msra.mxu0 0.0
      %1479 = vmatprep.subr.mxu0 0.0
      %1480 = vmatpush1.msra.mxu0 0.0
      %1481 = vmatprep.subr.mxu0 0.0
      %1482 = vmatpush1.msra.mxu0 0.0
      %1483 = vmatprep.subr.mxu0 0.0
      %1484 = vmatpush1.msra.mxu0 0.0
      %1485 = vmatprep.subr.mxu0 0.0
      %1486 = vmatpush1.msra.mxu0 0.0
      %1487 = vmatprep.subr.mxu0 0.0
      %1488 = vmatpush1.msra.mxu0 0.0
      %1489 = vmatprep.subr.mxu0 0.0
      %1490 = vmatpush1.msra.mxu0 0.0
      %1491 = vmatprep.subr.mxu0 %v1388
      %1492 = vmatpush1.msra.mxu0 %v1386
      %1493 = vmatprep.subr.mxu0 0.0
      %1494 = vmatpush2.msra.mxu0 0.0
      %1495 = vmatprep.subr.mxu0 0.0
      %1496 = vmatpush2.msra.mxu0 0.0
      %1497 = vmatprep.subr.mxu0 0.0
      %1498 = vmatpush2.msra.mxu0 0.0
      %1499 = vmatprep.subr.mxu0 0.0
      %1500 = vmatpush2.msra.mxu0 0.0
      %1501 = vmatprep.subr.mxu0 0.0
      %1502 = vmatpush2.msra.mxu0 0.0
      %1503 = vmatprep.subr.mxu0 0.0
      %1504 = vmatpush2.msra.mxu0 0.0
      %1505 = vmatprep.subr.mxu0 0.0
      %1506 = vmatpush2.msra.mxu0 0.0
      %1507 = vmatprep.subr.mxu0 0.0
      %1508 = vmatpush2.msra.mxu0 0.0
      %1509 = vmatprep.subr.mxu0 0.0
      %1510 = vmatpush2.msra.mxu0 0.0
      %1511 = vmatprep.subr.mxu0 0.0
      %1512 = vmatpush2.msra.mxu0 0.0
      %1513 = vmatprep.subr.mxu0 0.0
      %1514 = vmatpush2.msra.mxu0 0.0
      %1515 = vmatprep.subr.mxu0 0.0
      %1516 = vmatpush2.msra.mxu0 0.0
      %1517 = vmatprep.subr.mxu0 0.0
      %1518 = vmatpush2.msra.mxu0 0.0
      %1519 = vmatprep.subr.mxu0 0.0
      %1520 = vmatpush2.msra.mxu0 0.0
      %1521 = vmatprep.subr.mxu0 0.0
      %1522 = vmatpush2.msra.mxu0 0.0
      %1523 = vmatprep.subr.mxu0 0.0
      %1524 = vmatpush2.msra.mxu0 0.0
      %1525 = vmatprep.mubr.f32.mxu0 0.0
      %1526 = vmatmul.mubr.f32.gmra.mxu0 %v1380
      %v1527 = vpop.f32.mrf.mxu0
      %v1528 = vadd.f32 0.0, %v1527
      %v1529 = vpop.f32.mrf.mxu0
      %v1530 = vadd.f32 0.0, %v1529
      %1531 = vdwg.mxu0
      %v1532 = vadd.f32 %v1350, %v1457
      %v1533 = vadd.f32 %v1351, %v1459
      %v1534 = vadd.f32 %v1352, %v1528
      %v1535 = vadd.f32 %v1353, %v1530
      %v1536 = vld [vmem:[#allocation2] sm:$0xff]
      %v1537 = vld [vmem:[#allocation2 + $0x8] sm:$0xff]
      %v1538 = vld [vmem:[#allocation2 + $0x10] sm:$0xf]
      %s1539 = scalar_lea.vmem %s1, 56
      %v1540 = vld [vmem:[%s1539] sm:$0xff]
      %v1544 = vcombine.high %v1536, %v1536
      %v1545 = vcombine.high %v1537, %v1537
      %1546 = vrot.lane.b32.xlu0 %v1536, 91
      %v1547 = vpop.permute.xlu0 %1546
      %1548 = vrot.lane.b32.xlu0 %v1544, 91
      %v1549 = vpop.permute.xlu0 %1548
      %1550 = vrot.lane.b32.xlu0 %v1537, 91
      %v1551 = vpop.permute.xlu0 %1550
      %1552 = vrot.lane.b32.xlu0 %v1545, 91
      %v1553 = vpop.permute.xlu0 %1552
      %1554 = vrot.lane.b32.xlu0 %v1538, 91
      %v1555 = vpop.permute.xlu0 %1554
      %vm1556 = vcmask 744448
      %v1557 = vsel %vm1556, %v1547, %v1549
      %v1558 = vsel %vm1556, %v1549, %v1551
      %v1559 = vsel %vm1556, %v1551, %v1553
      %v1560 = vsel %vm1556, %v1553, %v1555
      %v1562 = vsel %vm314, %v1540, 0
      %v1564 = vsel %vm318, %v1557, 0
      %v1566 = vsel %vm318, %v1558, 0
      %v1568 = vsel %vm318, %v1559, 0
      %v1570 = vsel %vm318, %v1560, 0
      %1572 = vmatprep.subr.mxu0 0.0
      %1573 = vmatpush1.msra.mxu0 0.0
      %1574 = vmatprep.subr.mxu0 0.0
      %1575 = vmatpush1.msra.mxu0 0.0
      %1576 = vmatprep.subr.mxu0 0.0
      %1577 = vmatpush1.msra.mxu0 0.0
      %1578 = vmatprep.subr.mxu0 0.0
      %1579 = vmatpush1.msra.mxu0 0.0
      %1580 = vmatprep.subr.mxu0 0.0
      %1581 = vmatpush1.msra.mxu0 0.0
      %1582 = vmatprep.subr.mxu0 0.0
      %1583 = vmatpush1.msra.mxu0 0.0
      %1584 = vmatprep.subr.mxu0 0.0
      %1585 = vmatpush1.msra.mxu0 0.0
      %1586 = vmatprep.subr.mxu0 0.0
      %1587 = vmatpush1.msra.mxu0 0.0
      %1588 = vmatprep.subr.mxu0 0.0
      %1589 = vmatpush1.msra.mxu0 0.0
      %1590 = vmatprep.subr.mxu0 0.0
      %1591 = vmatpush1.msra.mxu0 0.0
      %1592 = vmatprep.subr.mxu0 0.0
      %1593 = vmatpush1.msra.mxu0 0.0
      %1594 = vmatprep.subr.mxu0 0.0
      %1595 = vmatpush1.msra.mxu0 0.0
      %1596 = vmatprep.subr.mxu0 0.0
      %1597 = vmatpush1.msra.mxu0 0.0
      %1598 = vmatprep.subr.mxu0 0.0
      %1599 = vmatpush1.msra.mxu0 0.0
      %1600 = vmatprep.subr.mxu0 0.0
      %1601 = vmatpush1.msra.mxu0 0.0
      %1602 = vmatprep.subr.mxu0 %v1566
      %1603 = vmatpush1.msra.mxu0 %v1564
      %1604 = vmatprep.subr.mxu0 0.0
      %1605 = vmatpush2.msra.mxu0 0.0
      %1606 = vmatprep.subr.mxu0 0.0
      %1607 = vmatpush2.msra.mxu0 0.0
      %1608 = vmatprep.subr.mxu0 0.0
      %1609 = vmatpush2.msra.mxu0 0.0
      %1610 = vmatprep.subr.mxu0 0.0
      %1611 = vmatpush2.msra.mxu0 0.0
      %1612 = vmatprep.subr.mxu0 0.0
      %1613 = vmatpush2.msra.mxu0 0.0
      %1614 = vmatprep.subr.mxu0 0.0
      %1615 = vmatpush2.msra.mxu0 0.0
      %1616 = vmatprep.subr.mxu0 0.0
      %1617 = vmatpush2.msra.mxu0 0.0
      %1618 = vmatprep.subr.mxu0 0.0
      %1619 = vmatpush2.msra.mxu0 0.0
      %1620 = vmatprep.subr.mxu0 0.0
      %1621 = vmatpush2.msra.mxu0 0.0
      %1622 = vmatprep.subr.mxu0 0.0
      %1623 = vmatpush2.msra.mxu0 0.0
      %1624 = vmatprep.subr.mxu0 0.0
      %1625 = vmatpush2.msra.mxu0 0.0
      %1626 = vmatprep.subr.mxu0 0.0
      %1627 = vmatpush2.msra.mxu0 0.0
      %1628 = vmatprep.subr.mxu0 0.0
      %1629 = vmatpush2.msra.mxu0 0.0
      %1630 = vmatprep.subr.mxu0 0.0
      %1631 = vmatpush2.msra.mxu0 0.0
      %1632 = vmatprep.subr.mxu0 0.0
      %1633 = vmatpush2.msra.mxu0 0.0
      %1634 = vmatprep.subr.mxu0 0.0
      %1635 = vmatpush2.msra.mxu0 0.0
      %1636 = vmatprep.mubr.f32.mxu0 0.0
      %1637 = vmatmul.mubr.f32.gmra.mxu0 %v1562
      %v1638 = vpop.f32.mrf.mxu0
      %v1639 = vadd.f32 0.0, %v1638
      %v1640 = vpop.f32.mrf.mxu0
      %v1641 = vadd.f32 0.0, %v1640
      %1642 = vdwg.mxu0
      %1643 = vmatprep.subr.mxu0 0.0
      %1644 = vmatpush1.msra.mxu0 0.0
      %1645 = vmatprep.subr.mxu0 0.0
      %1646 = vmatpush1.msra.mxu0 0.0
      %1647 = vmatprep.subr.mxu0 0.0
      %1648 = vmatpush1.msra.mxu0 0.0
      %1649 = vmatprep.subr.mxu0 0.0
      %1650 = vmatpush1.msra.mxu0 0.0
      %1651 = vmatprep.subr.mxu0 0.0
      %1652 = vmatpush1.msra.mxu0 0.0
      %1653 = vmatprep.subr.mxu0 0.0
      %1654 = vmatpush1.msra.mxu0 0.0
      %1655 = vmatprep.subr.mxu0 0.0
      %1656 = vmatpush1.msra.mxu0 0.0
      %1657 = vmatprep.subr.mxu0 0.0
      %1658 = vmatpush1.msra.mxu0 0.0
      %1659 = vmatprep.subr.mxu0 0.0
      %1660 = vmatpush1.msra.mxu0 0.0
      %1661 = vmatprep.subr.mxu0 0.0
      %1662 = vmatpush1.msra.mxu0 0.0
      %1663 = vmatprep.subr.mxu0 0.0
      %1664 = vmatpush1.msra.mxu0 0.0
      %1665 = vmatprep.subr.mxu0 0.0
      %1666 = vmatpush1.msra.mxu0 0.0
      %1667 = vmatprep.subr.mxu0 0.0
      %1668 = vmatpush1.msra.mxu0 0.0
      %1669 = vmatprep.subr.mxu0 0.0
      %1670 = vmatpush1.msra.mxu0 0.0
      %1671 = vmatprep.subr.mxu0 0.0
      %1672 = vmatpush1.msra.mxu0 0.0
      %1673 = vmatprep.subr.mxu0 %v1570
      %1674 = vmatpush1.msra.mxu0 %v1568
      %1675 = vmatprep.subr.mxu0 0.0
      %1676 = vmatpush2.msra.mxu0 0.0
      %1677 = vmatprep.subr.mxu0 0.0
      %1678 = vmatpush2.msra.mxu0 0.0
      %1679 = vmatprep.subr.mxu0 0.0
      %1680 = vmatpush2.msra.mxu0 0.0
      %1681 = vmatprep.subr.mxu0 0.0
      %1682 = vmatpush2.msra.mxu0 0.0
      %1683 = vmatprep.subr.mxu0 0.0
      %1684 = vmatpush2.msra.mxu0 0.0
      %1685 = vmatprep.subr.mxu0 0.0
      %1686 = vmatpush2.msra.mxu0 0.0
      %1687 = vmatprep.subr.mxu0 0.0
      %1688 = vmatpush2.msra.mxu0 0.0
      %1689 = vmatprep.subr.mxu0 0.0
      %1690 = vmatpush2.msra.mxu0 0.0
      %1691 = vmatprep.subr.mxu0 0.0
      %1692 = vmatpush2.msra.mxu0 0.0
      %1693 = vmatprep.subr.mxu0 0.0
      %1694 = vmatpush2.msra.mxu0 0.0
      %1695 = vmatprep.subr.mxu0 0.0
      %1696 = vmatpush2.msra.mxu0 0.0
      %1697 = vmatprep.subr.mxu0 0.0
      %1698 = vmatpush2.msra.mxu0 0.0
      %1699 = vmatprep.subr.mxu0 0.0
      %1700 = vmatpush2.msra.mxu0 0.0
      %1701 = vmatprep.subr.mxu0 0.0
      %1702 = vmatpush2.msra.mxu0 0.0
      %1703 = vmatprep.subr.mxu0 0.0
      %1704 = vmatpush2.msra.mxu0 0.0
      %1705 = vmatprep.subr.mxu0 0.0
      %1706 = vmatpush2.msra.mxu0 0.0
      %1707 = vmatprep.mubr.f32.mxu0 0.0
      %1708 = vmatmul.mubr.f32.gmra.mxu0 %v1562
      %v1709 = vpop.f32.mrf.mxu0
      %v1710 = vadd.f32 0.0, %v1709
      %v1711 = vpop.f32.mrf.mxu0
      %v1712 = vadd.f32 0.0, %v1711
      %1713 = vdwg.mxu0
      %v1714 = vadd.f32 %v1532, %v1639
      %v1715 = vadd.f32 %v1533, %v1641
      %v1716 = vadd.f32 %v1534, %v1710
      %v1717 = vadd.f32 %v1535, %v1712
      %v1718 = vld [vmem:[#allocation2] sm:$0xff]
      %v1719 = vld [vmem:[#allocation2 + $0x8] sm:$0xff]
      %v1720 = vld [vmem:[#allocation2 + $0x10] sm:$0xf]
      %s1721 = scalar_lea.vmem %s1, 64
      %v1722 = vld [vmem:[%s1721] sm:$0xff]
      %v1726 = vcombine.high %v1718, %v1718
      %v1727 = vcombine.high %v1719, %v1719
      %1728 = vrot.lane.b32.xlu0 %v1718, 90
      %v1729 = vpop.permute.xlu0 %1728
      %1730 = vrot.lane.b32.xlu0 %v1726, 90
      %v1731 = vpop.permute.xlu0 %1730
      %1732 = vrot.lane.b32.xlu0 %v1719, 90
      %v1733 = vpop.permute.xlu0 %1732
      %1734 = vrot.lane.b32.xlu0 %v1727, 90
      %v1735 = vpop.permute.xlu0 %1734
      %1736 = vrot.lane.b32.xlu0 %v1720, 90
      %v1737 = vpop.permute.xlu0 %1736
      %vm1738 = vcmask 736256
      %v1739 = vsel %vm1738, %v1729, %v1731
      %v1740 = vsel %vm1738, %v1731, %v1733
      %v1741 = vsel %vm1738, %v1733, %v1735
      %v1742 = vsel %vm1738, %v1735, %v1737
      %v1744 = vsel %vm314, %v1722, 0
      %v1746 = vsel %vm318, %v1739, 0
      %v1748 = vsel %vm318, %v1740, 0
      %v1750 = vsel %vm318, %v1741, 0
      %v1752 = vsel %vm318, %v1742, 0
      %1754 = vmatprep.subr.mxu0 0.0
      %1755 = vmatpush1.msra.mxu0 0.0
      %1756 = vmatprep.subr.mxu0 0.0
      %1757 = vmatpush1.msra.mxu0 0.0
      %1758 = vmatprep.subr.mxu0 0.0
      %1759 = vmatpush1.msra.mxu0 0.0
      %1760 = vmatprep.subr.mxu0 0.0
      %1761 = vmatpush1.msra.mxu0 0.0
      %1762 = vmatprep.subr.mxu0 0.0
      %1763 = vmatpush1.msra.mxu0 0.0
      %1764 = vmatprep.subr.mxu0 0.0
      %1765 = vmatpush1.msra.mxu0 0.0
      %1766 = vmatprep.subr.mxu0 0.0
      %1767 = vmatpush1.msra.mxu0 0.0
      %1768 = vmatprep.subr.mxu0 0.0
      %1769 = vmatpush1.msra.mxu0 0.0
      %1770 = vmatprep.subr.mxu0 0.0
      %1771 = vmatpush1.msra.mxu0 0.0
      %1772 = vmatprep.subr.mxu0 0.0
      %1773 = vmatpush1.msra.mxu0 0.0
      %1774 = vmatprep.subr.mxu0 0.0
      %1775 = vmatpush1.msra.mxu0 0.0
      %1776 = vmatprep.subr.mxu0 0.0
      %1777 = vmatpush1.msra.mxu0 0.0
      %1778 = vmatprep.subr.mxu0 0.0
      %1779 = vmatpush1.msra.mxu0 0.0
      %1780 = vmatprep.subr.mxu0 0.0
      %1781 = vmatpush1.msra.mxu0 0.0
      %1782 = vmatprep.subr.mxu0 0.0
      %1783 = vmatpush1.msra.mxu0 0.0
      %1784 = vmatprep.subr.mxu0 %v1748
      %1785 = vmatpush1.msra.mxu0 %v1746
      %1786 = vmatprep.subr.mxu0 0.0
      %1787 = vmatpush2.msra.mxu0 0.0
      %1788 = vmatprep.subr.mxu0 0.0
      %1789 = vmatpush2.msra.mxu0 0.0
      %1790 = vmatprep.subr.mxu0 0.0
      %1791 = vmatpush2.msra.mxu0 0.0
      %1792 = vmatprep.subr.mxu0 0.0
      %1793 = vmatpush2.msra.mxu0 0.0
      %1794 = vmatprep.subr.mxu0 0.0
      %1795 = vmatpush2.msra.mxu0 0.0
      %1796 = vmatprep.subr.mxu0 0.0
      %1797 = vmatpush2.msra.mxu0 0.0
      %1798 = vmatprep.subr.mxu0 0.0
      %1799 = vmatpush2.msra.mxu0 0.0
      %1800 = vmatprep.subr.mxu0 0.0
      %1801 = vmatpush2.msra.mxu0 0.0
      %1802 = vmatprep.subr.mxu0 0.0
      %1803 = vmatpush2.msra.mxu0 0.0
      %1804 = vmatprep.subr.mxu0 0.0
      %1805 = vmatpush2.msra.mxu0 0.0
      %1806 = vmatprep.subr.mxu0 0.0
      %1807 = vmatpush2.msra.mxu0 0.0
      %1808 = vmatprep.subr.mxu0 0.0
      %1809 = vmatpush2.msra.mxu0 0.0
      %1810 = vmatprep.subr.mxu0 0.0
      %1811 = vmatpush2.msra.mxu0 0.0
      %1812 = vmatprep.subr.mxu0 0.0
      %1813 = vmatpush2.msra.mxu0 0.0
      %1814 = vmatprep.subr.mxu0 0.0
      %1815 = vmatpush2.msra.mxu0 0.0
      %1816 = vmatprep.subr.mxu0 0.0
      %1817 = vmatpush2.msra.mxu0 0.0
      %1818 = vmatprep.mubr.f32.mxu0 0.0
      %1819 = vmatmul.mubr.f32.gmra.mxu0 %v1744
      %v1820 = vpop.f32.mrf.mxu0
      %v1821 = vadd.f32 0.0, %v1820
      %v1822 = vpop.f32.mrf.mxu0
      %v1823 = vadd.f32 0.0, %v1822
      %1824 = vdwg.mxu0
      %1825 = vmatprep.subr.mxu0 0.0
      %1826 = vmatpush1.msra.mxu0 0.0
      %1827 = vmatprep.subr.mxu0 0.0
      %1828 = vmatpush1.msra.mxu0 0.0
      %1829 = vmatprep.subr.mxu0 0.0
      %1830 = vmatpush1.msra.mxu0 0.0
      %1831 = vmatprep.subr.mxu0 0.0
      %1832 = vmatpush1.msra.mxu0 0.0
      %1833 = vmatprep.subr.mxu0 0.0
      %1834 = vmatpush1.msra.mxu0 0.0
      %1835 = vmatprep.subr.mxu0 0.0
      %1836 = vmatpush1.msra.mxu0 0.0
      %1837 = vmatprep.subr.mxu0 0.0
      %1838 = vmatpush1.msra.mxu0 0.0
      %1839 = vmatprep.subr.mxu0 0.0
      %1840 = vmatpush1.msra.mxu0 0.0
      %1841 = vmatprep.subr.mxu0 0.0
      %1842 = vmatpush1.msra.mxu0 0.0
      %1843 = vmatprep.subr.mxu0 0.0
      %1844 = vmatpush1.msra.mxu0 0.0
      %1845 = vmatprep.subr.mxu0 0.0
      %1846 = vmatpush1.msra.mxu0 0.0
      %1847 = vmatprep.subr.mxu0 0.0
      %1848 = vmatpush1.msra.mxu0 0.0
      %1849 = vmatprep.subr.mxu0 0.0
      %1850 = vmatpush1.msra.mxu0 0.0
      %1851 = vmatprep.subr.mxu0 0.0
      %1852 = vmatpush1.msra.mxu0 0.0
      %1853 = vmatprep.subr.mxu0 0.0
      %1854 = vmatpush1.msra.mxu0 0.0
      %1855 = vmatprep.subr.mxu0 %v1752
      %1856 = vmatpush1.msra.mxu0 %v1750
      %1857 = vmatprep.subr.mxu0 0.0
      %1858 = vmatpush2.msra.mxu0 0.0
      %1859 = vmatprep.subr.mxu0 0.0
      %1860 = vmatpush2.msra.mxu0 0.0
      %1861 = vmatprep.subr.mxu0 0.0
      %1862 = vmatpush2.msra.mxu0 0.0
      %1863 = vmatprep.subr.mxu0 0.0
      %1864 = vmatpush2.msra.mxu0 0.0
      %1865 = vmatprep.subr.mxu0 0.0
      %1866 = vmatpush2.msra.mxu0 0.0
      %1867 = vmatprep.subr.mxu0 0.0
      %1868 = vmatpush2.msra.mxu0 0.0
      %1869 = vmatprep.subr.mxu0 0.0
      %1870 = vmatpush2.msra.mxu0 0.0
      %1871 = vmatprep.subr.mxu0 0.0
      %1872 = vmatpush2.msra.mxu0 0.0
      %1873 = vmatprep.subr.mxu0 0.0
      %1874 = vmatpush2.msra.mxu0 0.0
      %1875 = vmatprep.subr.mxu0 0.0
      %1876 = vmatpush2.msra.mxu0 0.0
      %1877 = vmatprep.subr.mxu0 0.0
      %1878 = vmatpush2.msra.mxu0 0.0
      %1879 = vmatprep.subr.mxu0 0.0
      %1880 = vmatpush2.msra.mxu0 0.0
      %1881 = vmatprep.subr.mxu0 0.0
      %1882 = vmatpush2.msra.mxu0 0.0
      %1883 = vmatprep.subr.mxu0 0.0
      %1884 = vmatpush2.msra.mxu0 0.0
      %1885 = vmatprep.subr.mxu0 0.0
      %1886 = vmatpush2.msra.mxu0 0.0
      %1887 = vmatprep.subr.mxu0 0.0
      %1888 = vmatpush2.msra.mxu0 0.0
      %1889 = vmatprep.mubr.f32.mxu0 0.0
      %1890 = vmatmul.mubr.f32.gmra.mxu0 %v1744
      %v1891 = vpop.f32.mrf.mxu0
      %v1892 = vadd.f32 0.0, %v1891
      %v1893 = vpop.f32.mrf.mxu0
      %v1894 = vadd.f32 0.0, %v1893
      %1895 = vdwg.mxu0
      %v1896 = vadd.f32 %v1714, %v1821
      %v1897 = vadd.f32 %v1715, %v1823
      %v1898 = vadd.f32 %v1716, %v1892
      %v1899 = vadd.f32 %v1717, %v1894
      %s1900 = sld [smem:[#allocation3]]
      %v1901 = vstv %s1900
      %v1902 = vmul.f32 %v1896, %v1901
      %v1903 = vmul.f32 %v1897, %v1901
      %v1904 = vmul.f32 %v1898, %v1901
      %v1905 = vmul.f32 %v1899, %v1901
      %v1906 = vld [vmem:[%s2] sm:$0xff]
      %1908 = vset.pattern.permute.xlu0 0
      %1909 = vperm.xlu0 %1908, %v1906
      %v1910 = vpop.permute.xlu0 %1909
      %v1912 = vadd.f32 %v1902, %v1910
      %v1913 = vadd.f32 %v1903, %v1910
      %v1914 = vadd.f32 %v1904, %v1910
      %v1915 = vadd.f32 %v1905, %v1910
      %1916 = vst [vmem:[%s278] sm:$0xff] %v1912
      %1917 = vst [vmem:[%s278 + $0x8] sm:$0xff] %v1913
      %1918 = vst [vmem:[%s278 + $0x10] sm:$0xff] %v1914
      %1919 = vst [vmem:[%s278 + $0x18] sm:$0xff] %v1915
      %s1920 = smul.u32 4, %s17
      %p1921 = scmp.lt.s32.totalorder %s1920, 7
      %s1922 = scalar_select %p1921, %s1920, 7
      %s1923 = smul.addr %s1922, 8
      %s1924 = scalar_lea.vmem %s5, %s1923
      // Predicated region
      $region41: #{spectral_conv2d.1} parent=39 // pred_check
        %p1925 = pneg %p154
      $region42: #{spectral_conv2d.1} parent=39 // pred_check_branch
        %1927 = sbr.rel (%p1925) target = $region44
      $region43: #{spectral_conv2d.1} parent=39 // pred_region
        %s1928 = smul.u32 4, %s17
      $region44: #{spectral_conv2d.1} parent=39 // pred_fallthru
        _
    $region40: #{spectral_conv2d.1} parent=5 // pred_fallthru
      _
    %p1929 = scmp.le.s32.totalorder 2, %s12
    // Predicated region
    $region45: #{spectral_conv2d.1} parent=5 // pred_check
      %p1930 = pneg %p1929
    $region46: #{spectral_conv2d.1} parent=5 // pred_check_branch
      %1932 = sbr.rel (%p1930) target = $region48
    $region47: #{spectral_conv2d.1} parent=5 // pred_region
      %s1933 = ssub.s32 %s12, 2
      // Predicated region
      $region49: #{spectral_conv2d.1} parent=47 // pred_check
        %p1934 = pneg %p160
      $region50: #{spectral_conv2d.1} parent=47 // pred_check_branch
        %1936 = sbr.rel (%p1934) target = $region52
      $region51: #{spectral_conv2d.1} parent=47 // pred_region
        %s1937 = smul.u32 4, %s18
        %p1938 = scmp.lt.s32.totalorder %s1937, 7
        %s1939 = scalar_select %p1938, %s1937, 7
        %s1940 = smul.addr %s1939, 8
        %s1941 = scalar_lea.vmem %s5, %s1940
      $region52: #{spectral_conv2d.1} parent=47 // pred_fallthru
        _
    $region48: #{spectral_conv2d.1} parent=5 // pred_fallthru
      _
  $region6: #{spectral_conv2d.1} parent=0 // loop_footer
    %s16 = sadd.s32 1, %s12
  $region7: #{spectral_conv2d.1} parent=0 // loop_footer_branch
    %11 = sbr.rel target = $region3
  $region8: #{spectral_conv2d.1} parent=0 // loop_exit
    _

</llo_original>
